<compile_context>
chip_gen: v7x
topology: tpu7x:2x2x1
jax: 0.10.0
libtpu: 0.0.40
codegen_flags: <defaults>
</compile_context>

<pallas_src>
import functools

import jax
import jax.numpy as jnp
import numpy as np
from jax import lax
from jax.experimental import pallas as pl
from jax.experimental.pallas import tpu as pltpu


def _round_up(x: int, m: int) -> int:
    return (x + m - 1) // m * m


def _ceil_div(a: int, b: int) -> int:
    return -(-a // b)


# ----------------------------------------------------------------------------
# Fused kernel: conv3x3+ReLU -> conv3x3+ReLU -> flatten -> linear, all in VMEM.
#
# Activation layout: rows = (board_row h, batch b), lanes = (board_col w, ch c).
# xs_ref  : (H, TB, 3*W*C_in)    kh-stacked, row-padded packed input tile (bf16)
# w1_ref  : (3*W*C_in, W*C1)     kh-concat banded conv1 weight (kw+col-pad folded)
# w2_ref  : (3, W*C1, W*C2)      per-kh banded conv2 weights (kw+col-pad folded)
# w3_ref  : (H, W*C2, MP)        per-board-row slices of the Linear weight
# b*_ref  : f32 biases, tiled/padded to the packed lane layout
# h1p_ref : (H+2, TB, W*C1)      VMEM scratch: row-padded conv1 output (bf16)
# acc_ref : (H*TB, W*C2)         VMEM scratch: f32 conv2 accumulator
# ----------------------------------------------------------------------------
def _chess_fused_kernel(xs_ref, w1_ref, b1_ref, w2_ref, b2_ref, w3_ref, b3_ref,
                        out_ref, h1p_ref, acc_ref, *, tb, c_in, c1, c2, h, w):
    rows = h * tb
    cdt = w1_ref.dtype  # MXU compute dtype (bf16)

    # ---- layer 1: Conv2d(c_in -> c1, 3x3, pad=1) + ReLU — single matmul -----
    a1 = jnp.dot(xs_ref[...].reshape(rows, 3 * w * c_in), w1_ref[...],
                 preferred_element_type=jnp.float32)               # (rows, w*c1)
    h1 = jnp.maximum(a1 + b1_ref[...], 0.0).astype(cdt)

    # Stage the ReLU output into the row-padded VMEM scratch (lane-dense write,
    # valid data starts at lane 0). Zero the two border rows EVERY step: it is
    # a few KiB and keeps each grid step independent (safe under "parallel"
    # sharding across v7x's two TensorCores — the old program_id==0 gate was a
    # correctness hazard there).
    h1p_ref[0, :, :] = jnp.zeros((tb, w * c1), h1p_ref.dtype)
    h1p_ref[h + 1, :, :] = jnp.zeros((tb, w * c1), h1p_ref.dtype)
    h1p_ref[1:1 + h, :, :] = h1.reshape(h, tb, w * c1)

    # ---- layer 2: Conv2d(c1 -> c2, 3x3, pad=1) + ReLU — 3 banded matmuls ----
    # One matmul per kh; operands are full-width lane-aligned slabs; the f32
    # accumulator lives explicitly in VMEM scratch.
    acc_ref[...] = jnp.dot(h1p_ref[0:h, :, :].reshape(rows, w * c1), w2_ref[0],
                           preferred_element_type=jnp.float32)
    acc_ref[...] += jnp.dot(h1p_ref[1:1 + h, :, :].reshape(rows, w * c1), w2_ref[1],
                            preferred_element_type=jnp.float32)
    acc_ref[...] += jnp.dot(h1p_ref[2:2 + h, :, :].reshape(rows, w * c1), w2_ref[2],
                            preferred_element_type=jnp.float32)
    h2 = jnp.maximum(acc_ref[...] + b2_ref[...], 0.0).astype(cdt)  # (rows, w*c2)
    h2 = h2.reshape(h, tb, w * c2)

    # ---- layer 3: Flatten + Linear — per-board-row matmuls accumulated ------
    # directly into the (lane-dense, 128-wide) output tile; first matmul also
    # carries the bias (no zeros+add pass).
    out_ref[...] = (jnp.dot(h2[0], w3_ref[0], preferred_element_type=jnp.float32)
                    + b3_ref[...])
    for hh in range(1, h):
        out_ref[...] += jnp.dot(h2[hh], w3_ref[hh],
                                preferred_element_type=jnp.float32)


# ----------------------------------------------------------------------------
# One-time host-side weight packing (PyTorch layouts in, kernel layouts out).
# ----------------------------------------------------------------------------
def prepare_params(params, compute_dtype=jnp.bfloat16):
    w1, b1 = params["w1"], params["b1"]          # (C1, C_in, 3, 3), (C1,)
    w2, b2 = params["w2"], params["b2"]          # (C2, C1, 3, 3), (C2,)
    w3, b3 = params["w3"], params["b3"]          # (C2*H*W, M) NCHW-flatten, (M,)
    C1, C_in = int(w1.shape[0]), int(w1.shape[1])
    C2 = int(w2.shape[0])
    M = int(w3.shape[1])
    H = W = 8                                    # chess board
    MP = _round_up(max(M, 1), 128)               # lane-dense logits slab

    # Band selector over board columns: out column w_out reads input column
    # w_in = w_out + kw - 1 (the "same" zero padding is implicit — taps that
    # fall off the board simply don't appear in the band).
    wi = jnp.arange(W)[:, None, None]
    wo = jnp.arange(W)[None, :, None]
    kw = jnp.arange(3)[None, None, :]
    sel = (wi - wo + 1 == kw).astype(jnp.float32)              # (W_in, W_out, kw)

    def banded_taps(wconv):                                    # (Cout, Cin, 3, 3)
        taps = jnp.transpose(wconv, (2, 3, 1, 0))              # (kh, kw, ci, co)
        # [kh, w_in, ci, w_out, co]
        return jnp.einsum("abk,hkcd->hacbd", sel, taps)

    cin, c1c = C_in, C1
    # conv1: kh-concatenated banded weight -> single matmul with K = 3*W*C_in.
    bw1 = banded_taps(w1).reshape(3 * W * C_in, W * C1)
    # conv2: one banded weight per kh -> 3 accumulated matmuls with K = W*C1.
    bw2 = banded_taps(w2).reshape(3, W * C1, W * C2)

    # Linear: PyTorch flatten order is c*H*W + h*W + w; regroup as
    # [h, w*C2 + c, m] so the kernel's (board_row, (col, channel)) rows feed it
    # directly; zero-pad the move axis to a multiple of 128 lanes.
    w3_hwc = jnp.transpose(w3.reshape(C2, H, W, M), (1, 2, 0, 3)).reshape(H, W * C2, M)
    w3_p = jnp.pad(w3_hwc, ((0, 0), (0, 0), (0, MP - M)))

    return {
        "bw1": bw1.astype(compute_dtype),                         # (3*W*Cin, W*C1)
        "b1": jnp.tile(b1.astype(jnp.float32), W)[None, :],       # (1, W*C1)
        "bw2": bw2.astype(compute_dtype),                         # (3, W*C1, W*C2)
        "b2": jnp.tile(b2.astype(jnp.float32), W)[None, :],       # (1, W*C2)
        "w3": w3_p.astype(compute_dtype),                         # (H, W*C2, MP)
        "b3": jnp.pad(b3.astype(jnp.float32), (0, MP - M))[None, :],  # (1, MP)
    }


# ----------------------------------------------------------------------------
# Forward pass: one fused pallas_call.
# ----------------------------------------------------------------------------
@functools.partial(jax.jit, static_argnames=("num_moves",))
def chess_model_forward(x, pp, *, num_moves):
    N, C_in, H, W = x.shape
    C1 = pp["bw1"].shape[1] // W
    C2 = pp["bw2"].shape[2] // W
    MP = pp["w3"].shape[-1]
    cdt = pp["bw1"].dtype

    # Batch tiling: TB multiple of 8 (sublane alignment), capped at 256 so per
    # step VMEM stays a few MiB (fine on v5e/v6e/v7x). Mid/large batches are
    # split into an EVEN number of >= 2 grid steps so both v7x TensorCores get
    # work under "parallel" semantics.
    TB_CAP = 256
    if N <= 8:
        TB = 8
    else:
        steps = max(2, _ceil_div(N, TB_CAP))
        steps += steps % 2
        TB = _round_up(_ceil_div(N, steps), 8)
    NP = _round_up(N, TB)

    # Pack input once (single XLA preamble fusion: transpose+pad+cast+concat):
    # NCHW -> rows=(board_row, batch), lanes=(kh, board_col, channel), with a
    # 1-row zero border folded in by the kh-stacking. Column padding is folded
    # into the banded weights, so lanes carry only valid columns.
    xt = jnp.transpose(x, (2, 0, 3, 1))                            # (H, N, W, C_in)
    xt = jnp.pad(xt, ((1, 1), (0, NP - N), (0, 0), (0, 0)))        # (H+2, NP, W, C_in)
    xt = xt.reshape(H + 2, NP, W * C_in).astype(cdt)
    xs = jnp.concatenate([xt[0:H], xt[1:H + 1], xt[2:H + 2]], axis=-1)  # (H, NP, 3*W*C_in)

    kernel = functools.partial(_chess_fused_kernel,
                               tb=TB, c_in=C_in, c1=C1, c2=C2, h=H, w=W)

    out = pl.pallas_call(
        kernel,
        out_shape=jax.ShapeDtypeStruct((NP, MP), jnp.float32),
        grid=(NP // TB,),
        in_specs=[
            pl.BlockSpec((H, TB, 3 * W * C_in), lambda i: (0, i, 0)),   # xs tile
            pl.BlockSpec((3 * W * C_in, W * C1), lambda i: (0, 0)),     # bw1
            pl.BlockSpec((1, W * C1), lambda i: (0, 0)),                # b1
            pl.BlockSpec((3, W * C1, W * C2), lambda i: (0, 0, 0)),     # bw2
            pl.BlockSpec((1, W * C2), lambda i: (0, 0)),                # b2
            pl.BlockSpec((H, W * C2, MP), lambda i: (0, 0, 0)),         # w3
            pl.BlockSpec((1, MP), lambda i: (0, 0)),                    # b3
        ],
        out_specs=pl.BlockSpec((TB, MP), lambda i: (i, 0)),
        scratch_shapes=[
            pltpu.VMEM((H + 2, TB, W * C1), cdt),        # row-padded conv1 output
            pltpu.VMEM((H * TB, W * C2), jnp.float32),   # conv2 f32 accumulator
        ],
        compiler_params=pltpu.CompilerParams(dimension_semantics=("parallel",)),
    )(xs, pp["bw1"], pp["b1"], pp["bw2"], pp["b2"], pp["w3"], pp["b3"])

    return out[:N, :num_moves]


# ----------------------------------------------------------------------------
# Pure-JAX f32 reference (lax.conv) for correctness check.
# ----------------------------------------------------------------------------
def reference_forward(x, params):
    def conv(x, w, b):
        y = lax.conv_general_dilated(
            x, w, window_strides=(1, 1), padding=((1, 1), (1, 1)),
            dimension_numbers=("NCHW", "OIHW", "NCHW"))
        return y + b[None, :, None, None]

    h = jnp.maximum(conv(x, params["w1"], params["b1"]), 0.0)
    h = jnp.maximum(conv(h, params["w2"], params["b2"]), 0.0)
    flat = h.reshape(h.shape[0], -1)
    return flat @ params["w3"] + params["b3"]


if __name__ == "__main__":
    # Chess-shaped problem: 4 input planes, 8x8 board, 32 encoded moves.
    N, C_in, H, W = 2, 4, 8, 8
    C1, C2 = 8, 16
    num_moves = 32

    key = jax.random.PRNGKey(0)
    k_x, k_xb, k1, k2, k3, kb1, kb2, kb3 = jax.random.split(key, 8)

    x = jax.random.normal(k_x, (N, C_in, H, W), dtype=jnp.float32)
    params = {
        "w1": 0.1 * jax.random.normal(k1, (C1, C_in, 3, 3), dtype=jnp.float32),
        "b1": 0.1 * jax.random.normal(kb1, (C1,), dtype=jnp.float32),
        "w2": 0.1 * jax.random.normal(k2, (C2, C1, 3, 3), dtype=jnp.float32),
        "b2": 0.1 * jax.random.normal(kb2, (C2,), dtype=jnp.float32),
        "w3": 0.05 * jax.random.normal(k3, (C2 * H * W, num_moves), dtype=jnp.float32),
        "b3": 0.05 * jax.random.normal(kb3, (num_moves,), dtype=jnp.float32),
    }

    # One-time weight packing (done at model-load time in production).
    pp = jax.block_until_ready(prepare_params(params))

    # Small batch (single grid step).
    logits = jax.block_until_ready(chess_model_forward(x, pp, num_moves=num_moves))
    ref = jax.block_until_ready(reference_forward(x, params))
    assert logits.shape == (N, num_moves), logits.shape
    # bf16 MXU operands with f32 accumulation (intentional precision trade) ->
    # relaxed tolerance vs the f32 reference.
    np.testing.assert_allclose(np.asarray(logits), np.asarray(ref), rtol=3e-2, atol=3e-2)

    # Multi-step batch (grid >= 2: exercises batch tiling / padding and the
    # per-step scratch-border re-zeroing used for multi-TensorCore safety).
    Nb = 20
    xb = jax.random.normal(k_xb, (Nb, C_in, H, W), dtype=jnp.float32)
    logits_b = jax.block_until_ready(chess_model_forward(xb, pp, num_moves=num_moves))
    ref_b = jax.block_until_ready(reference_forward(xb, params))
    assert logits_b.shape == (Nb, num_moves), logits_b.shape
    np.testing.assert_allclose(np.asarray(logits_b), np.asarray(ref_b), rtol=3e-2, atol=3e-2)

    # TODO(synk): predict()/get_best_move()/play_move() (softmax, argsort, move
    # legality, board flipping) are host-side game logic, not kernelized.
    print("KERNEL_OK")
</pallas_src>

<mosaic_0001>
module attributes {stable_mosaic.version = 11 : i64} {
  func.func @_chess_fused_kernel(%arg0: i32, %arg1: memref<8x8x96xbf16, #tpu.memory_space<vmem>>, %arg2: memref<96x64xbf16, #tpu.memory_space<vmem>>, %arg3: memref<1x64xf32, #tpu.memory_space<vmem>>, %arg4: memref<3x64x128xbf16, #tpu.memory_space<vmem>>, %arg5: memref<1x128xf32, #tpu.memory_space<vmem>>, %arg6: memref<8x128x128xbf16, #tpu.memory_space<vmem>>, %arg7: memref<1x128xf32, #tpu.memory_space<vmem>>, %arg8: memref<8x128xf32, #tpu.memory_space<vmem>>, %arg9: memref<10x8x64xbf16, #tpu.memory_space<vmem>>, %arg10: memref<64x128xf32, #tpu.memory_space<vmem>>) attributes {dimension_semantics = [#tpu.dimension_semantics<parallel>], iteration_bounds = array<i64: 1>, scalar_prefetch = 0 : i64, scratch_operands = 2 : i64, tpu.core_type = #tpu.core_type<tc>, window_params = [{transform_indices = @transform_0, window_bounds = array<i64: 8, 8, 96>}, {pipeline_mode = #tpu.pipeline_mode<synchronous>, transform_indices = @transform_1, window_bounds = array<i64: 96, 64>}, {pipeline_mode = #tpu.pipeline_mode<synchronous>, transform_indices = @transform_2, window_bounds = array<i64: 1, 64>}, {pipeline_mode = #tpu.pipeline_mode<synchronous>, transform_indices = @transform_3, window_bounds = array<i64: 3, 64, 128>}, {pipeline_mode = #tpu.pipeline_mode<synchronous>, transform_indices = @transform_4, window_bounds = array<i64: 1, 128>}, {pipeline_mode = #tpu.pipeline_mode<synchronous>, transform_indices = @transform_5, window_bounds = array<i64: 8, 128, 128>}, {pipeline_mode = #tpu.pipeline_mode<synchronous>, transform_indices = @transform_6, window_bounds = array<i64: 1, 128>}, {transform_indices = @transform_7, window_bounds = array<i64: 8, 128>}]} {
    %c0 = arith.constant 0 : index
    %c0_0 = arith.constant 0 : index
    %c0_1 = arith.constant 0 : index
    %0 = vector.load %arg1[%c0, %c0_0, %c0_1] : memref<8x8x96xbf16, #tpu.memory_space<vmem>>, vector<8x8x96xbf16>
    %1 = vector.shape_cast %0 : vector<8x8x96xbf16> to vector<64x96xbf16>
    %c0_2 = arith.constant 0 : index
    %c0_3 = arith.constant 0 : index
    %2 = vector.load %arg2[%c0_2, %c0_3] : memref<96x64xbf16, #tpu.memory_space<vmem>>, vector<96x64xbf16>
    %cst = arith.constant dense<0.000000e+00> : vector<64x64xf32>
    %3 = tpu.matmul %1, %2, %cst {dimension_numbers = #tpu.dot_dimension_numbers<[1], [0], [0], [1], [0, 0, 1, 1], [], []>} : vector<64x96xbf16>, vector<96x64xbf16>, vector<64x64xf32> -> vector<64x64xf32>
    %c0_4 = arith.constant 0 : index
    %c0_5 = arith.constant 0 : index
    %4 = vector.load %arg3[%c0_4, %c0_5] : memref<1x64xf32, #tpu.memory_space<vmem>>, vector<1x64xf32>
    %5 = vector.broadcast %4 : vector<1x64xf32> to vector<64x64xf32>
    %6 = arith.addf %3, %5 : vector<64x64xf32>
    %cst_6 = arith.constant 0.000000e+00 : f32
    %7 = vector.broadcast %cst_6 : f32 to vector<64x64xf32>
    %8 = arith.maximumf %6, %7 : vector<64x64xf32>
    %9 = arith.truncf %8 : vector<64x64xf32> to vector<64x64xbf16>
    %cst_7 = arith.constant 0.000000e+00 : bf16
    %10 = vector.broadcast %cst_7 : bf16 to vector<8x64xbf16>
    %c0_8 = arith.constant 0 : index
    %c0_9 = arith.constant 0 : index
    %c0_10 = arith.constant 0 : index
    %11 = vector.load %arg9[%c0_8, %c0_9, %c0_10] : memref<10x8x64xbf16, #tpu.memory_space<vmem>>, vector<1x8x64xbf16>
    %12 = vector.shape_cast %11 : vector<1x8x64xbf16> to vector<8x64xbf16>
    %13 = vector.shape_cast %10 : vector<8x64xbf16> to vector<1x8x64xbf16>
    tpu.vector_store %arg9[%c0_8, %c0_9, %c0_10], %13 {strides = array<i32>} : memref<10x8x64xbf16, #tpu.memory_space<vmem>>, vector<1x8x64xbf16>,
    %cst_11 = arith.constant 0.000000e+00 : bf16
    %14 = vector.broadcast %cst_11 : bf16 to vector<8x64xbf16>
    %c9 = arith.constant 9 : index
    %c0_12 = arith.constant 0 : index
    %c0_13 = arith.constant 0 : index
    %15 = vector.load %arg9[%c9, %c0_12, %c0_13] : memref<10x8x64xbf16, #tpu.memory_space<vmem>>, vector<1x8x64xbf16>
    %16 = vector.shape_cast %15 : vector<1x8x64xbf16> to vector<8x64xbf16>
    %17 = vector.shape_cast %14 : vector<8x64xbf16> to vector<1x8x64xbf16>
    tpu.vector_store %arg9[%c9, %c0_12, %c0_13], %17 {strides = array<i32>} : memref<10x8x64xbf16, #tpu.memory_space<vmem>>, vector<1x8x64xbf16>,
    %18 = vector.shape_cast %9 : vector<64x64xbf16> to vector<8x8x64xbf16>
    %c1 = arith.constant 1 : index
    %c0_14 = arith.constant 0 : index
    %c0_15 = arith.constant 0 : index
    %19 = vector.load %arg9[%c1, %c0_14, %c0_15] : memref<10x8x64xbf16, #tpu.memory_space<vmem>>, vector<8x8x64xbf16>
    tpu.vector_store %arg9[%c1, %c0_14, %c0_15], %18 {strides = array<i32>} : memref<10x8x64xbf16, #tpu.memory_space<vmem>>, vector<8x8x64xbf16>,
    %c0_16 = arith.constant 0 : index
    %c0_17 = arith.constant 0 : index
    %c0_18 = arith.constant 0 : index
    %20 = vector.load %arg9[%c0_16, %c0_17, %c0_18] : memref<10x8x64xbf16, #tpu.memory_space<vmem>>, vector<8x8x64xbf16>
    %21 = vector.shape_cast %20 : vector<8x8x64xbf16> to vector<64x64xbf16>
    %c0_19 = arith.constant 0 : index
    %c0_20 = arith.constant 0 : index
    %c0_21 = arith.constant 0 : index
    %22 = vector.load %arg4[%c0_19, %c0_20, %c0_21] : memref<3x64x128xbf16, #tpu.memory_space<vmem>>, vector<1x64x128xbf16>
    %23 = vector.shape_cast %22 : vector<1x64x128xbf16> to vector<64x128xbf16>
    %cst_22 = arith.constant dense<0.000000e+00> : vector<64x128xf32>
    %24 = tpu.matmul %21, %23, %cst_22 {dimension_numbers = #tpu.dot_dimension_numbers<[1], [0], [0], [1], [0, 0, 1, 1], [], []>} : vector<64x64xbf16>, vector<64x128xbf16>, vector<64x128xf32> -> vector<64x128xf32>
    %c0_23 = arith.constant 0 : index
    %c0_24 = arith.constant 0 : index
    %25 = vector.load %arg10[%c0_23, %c0_24] : memref<64x128xf32, #tpu.memory_space<vmem>>, vector<64x128xf32>
    tpu.vector_store %arg10[%c0_23, %c0_24], %24 {strides = array<i32>} : memref<64x128xf32, #tpu.memory_space<vmem>>, vector<64x128xf32>,
    %c0_25 = arith.constant 0 : index
    %c0_26 = arith.constant 0 : index
    %26 = vector.load %arg10[%c0_25, %c0_26] : memref<64x128xf32, #tpu.memory_space<vmem>>, vector<64x128xf32>
    %c1_27 = arith.constant 1 : index
    %c0_28 = arith.constant 0 : index
    %c0_29 = arith.constant 0 : index
    %27 = vector.load %arg9[%c1_27, %c0_28, %c0_29] : memref<10x8x64xbf16, #tpu.memory_space<vmem>>, vector<8x8x64xbf16>
    %28 = vector.shape_cast %27 : vector<8x8x64xbf16> to vector<64x64xbf16>
    %c1_30 = arith.constant 1 : index
    %c0_31 = arith.constant 0 : index
    %c0_32 = arith.constant 0 : index
    %29 = vector.load %arg4[%c1_30, %c0_31, %c0_32] : memref<3x64x128xbf16, #tpu.memory_space<vmem>>, vector<1x64x128xbf16>
    %30 = vector.shape_cast %29 : vector<1x64x128xbf16> to vector<64x128xbf16>
    %cst_33 = arith.constant dense<0.000000e+00> : vector<64x128xf32>
    %31 = tpu.matmul %28, %30, %cst_33 {dimension_numbers = #tpu.dot_dimension_numbers<[1], [0], [0], [1], [0, 0, 1, 1], [], []>} : vector<64x64xbf16>, vector<64x128xbf16>, vector<64x128xf32> -> vector<64x128xf32>
    %32 = arith.addf %26, %31 : vector<64x128xf32>
    %c0_34 = arith.constant 0 : index
    %c0_35 = arith.constant 0 : index
    %33 = vector.load %arg10[%c0_34, %c0_35] : memref<64x128xf32, #tpu.memory_space<vmem>>, vector<64x128xf32>
    tpu.vector_store %arg10[%c0_34, %c0_35], %32 {strides = array<i32>} : memref<64x128xf32, #tpu.memory_space<vmem>>, vector<64x128xf32>,
    %c0_36 = arith.constant 0 : index
    %c0_37 = arith.constant 0 : index
    %34 = vector.load %arg10[%c0_36, %c0_37] : memref<64x128xf32, #tpu.memory_space<vmem>>, vector<64x128xf32>
    %c2 = arith.constant 2 : index
    %c0_38 = arith.constant 0 : index
    %c0_39 = arith.constant 0 : index
    %35 = vector.load %arg9[%c2, %c0_38, %c0_39] : memref<10x8x64xbf16, #tpu.memory_space<vmem>>, vector<8x8x64xbf16>
    %36 = vector.shape_cast %35 : vector<8x8x64xbf16> to vector<64x64xbf16>
    %c2_40 = arith.constant 2 : index
    %c0_41 = arith.constant 0 : index
    %c0_42 = arith.constant 0 : index
    %37 = vector.load %arg4[%c2_40, %c0_41, %c0_42] : memref<3x64x128xbf16, #tpu.memory_space<vmem>>, vector<1x64x128xbf16>
    %38 = vector.shape_cast %37 : vector<1x64x128xbf16> to vector<64x128xbf16>
    %cst_43 = arith.constant dense<0.000000e+00> : vector<64x128xf32>
    %39 = tpu.matmul %36, %38, %cst_43 {dimension_numbers = #tpu.dot_dimension_numbers<[1], [0], [0], [1], [0, 0, 1, 1], [], []>} : vector<64x64xbf16>, vector<64x128xbf16>, vector<64x128xf32> -> vector<64x128xf32>
    %40 = arith.addf %34, %39 : vector<64x128xf32>
    %c0_44 = arith.constant 0 : index
    %c0_45 = arith.constant 0 : index
    %41 = vector.load %arg10[%c0_44, %c0_45] : memref<64x128xf32, #tpu.memory_space<vmem>>, vector<64x128xf32>
    tpu.vector_store %arg10[%c0_44, %c0_45], %40 {strides = array<i32>} : memref<64x128xf32, #tpu.memory_space<vmem>>, vector<64x128xf32>,
    %c0_46 = arith.constant 0 : index
    %c0_47 = arith.constant 0 : index
    %42 = vector.load %arg10[%c0_46, %c0_47] : memref<64x128xf32, #tpu.memory_space<vmem>>, vector<64x128xf32>
    %c0_48 = arith.constant 0 : index
    %c0_49 = arith.constant 0 : index
    %43 = vector.load %arg5[%c0_48, %c0_49] : memref<1x128xf32, #tpu.memory_space<vmem>>, vector<1x128xf32>
    %44 = vector.broadcast %43 : vector<1x128xf32> to vector<64x128xf32>
    %45 = arith.addf %42, %44 : vector<64x128xf32>
    %cst_50 = arith.constant 0.000000e+00 : f32
    %46 = vector.broadcast %cst_50 : f32 to vector<64x128xf32>
    %47 = arith.maximumf %45, %46 : vector<64x128xf32>
    %48 = arith.truncf %47 : vector<64x128xf32> to vector<64x128xbf16>
    %49 = vector.shape_cast %48 : vector<64x128xbf16> to vector<8x8x128xbf16>
    %50 = vector.extract_strided_slice %49 {offsets = [0, 0, 0], sizes = [1, 8, 128], strides = [1, 1, 1]} : vector<8x8x128xbf16> to vector<1x8x128xbf16>
    %51 = vector.shape_cast %50 : vector<1x8x128xbf16> to vector<8x128xbf16>
    %c0_51 = arith.constant 0 : index
    %c0_52 = arith.constant 0 : index
    %c0_53 = arith.constant 0 : index
    %52 = vector.load %arg6[%c0_51, %c0_52, %c0_53] : memref<8x128x128xbf16, #tpu.memory_space<vmem>>, vector<1x128x128xbf16>
    %53 = vector.shape_cast %52 : vector<1x128x128xbf16> to vector<128x128xbf16>
    %cst_54 = arith.constant dense<0.000000e+00> : vector<8x128xf32>
    %54 = tpu.matmul %51, %53, %cst_54 {dimension_numbers = #tpu.dot_dimension_numbers<[1], [0], [0], [1], [0, 0, 1, 1], [], []>} : vector<8x128xbf16>, vector<128x128xbf16>, vector<8x128xf32> -> vector<8x128xf32>
    %c0_55 = arith.constant 0 : index
    %c0_56 = arith.constant 0 : index
    %55 = vector.load %arg7[%c0_55, %c0_56] : memref<1x128xf32, #tpu.memory_space<vmem>>, vector<1x128xf32>
    %56 = vector.broadcast %55 : vector<1x128xf32> to vector<8x128xf32>
    %57 = arith.addf %54, %56 : vector<8x128xf32>
    %c0_57 = arith.constant 0 : index
    %c0_58 = arith.constant 0 : index
    %58 = vector.load %arg8[%c0_57, %c0_58] : memref<8x128xf32, #tpu.memory_space<vmem>>, vector<8x128xf32>
    tpu.vector_store %arg8[%c0_57, %c0_58], %57 {strides = array<i32>} : memref<8x128xf32, #tpu.memory_space<vmem>>, vector<8x128xf32>,
    %c0_59 = arith.constant 0 : index
    %c0_60 = arith.constant 0 : index
    %59 = vector.load %arg8[%c0_59, %c0_60] : memref<8x128xf32, #tpu.memory_space<vmem>>, vector<8x128xf32>
    %60 = vector.extract_strided_slice %49 {offsets = [1, 0, 0], sizes = [1, 8, 128], strides = [1, 1, 1]} : vector<8x8x128xbf16> to vector<1x8x128xbf16>
    %61 = vector.shape_cast %60 : vector<1x8x128xbf16> to vector<8x128xbf16>
    %c1_61 = arith.constant 1 : index
    %c0_62 = arith.constant 0 : index
    %c0_63 = arith.constant 0 : index
    %62 = vector.load %arg6[%c1_61, %c0_62, %c0_63] : memref<8x128x128xbf16, #tpu.memory_space<vmem>>, vector<1x128x128xbf16>
    %63 = vector.shape_cast %62 : vector<1x128x128xbf16> to vector<128x128xbf16>
    %cst_64 = arith.constant dense<0.000000e+00> : vector<8x128xf32>
    %64 = tpu.matmul %61, %63, %cst_64 {dimension_numbers = #tpu.dot_dimension_numbers<[1], [0], [0], [1], [0, 0, 1, 1], [], []>} : vector<8x128xbf16>, vector<128x128xbf16>, vector<8x128xf32> -> vector<8x128xf32>
    %65 = arith.addf %59, %64 : vector<8x128xf32>
    %c0_65 = arith.constant 0 : index
    %c0_66 = arith.constant 0 : index
    %66 = vector.load %arg8[%c0_65, %c0_66] : memref<8x128xf32, #tpu.memory_space<vmem>>, vector<8x128xf32>
    tpu.vector_store %arg8[%c0_65, %c0_66], %65 {strides = array<i32>} : memref<8x128xf32, #tpu.memory_space<vmem>>, vector<8x128xf32>,
    %c0_67 = arith.constant 0 : index
    %c0_68 = arith.constant 0 : index
    %67 = vector.load %arg8[%c0_67, %c0_68] : memref<8x128xf32, #tpu.memory_space<vmem>>, vector<8x128xf32>
    %68 = vector.extract_strided_slice %49 {offsets = [2, 0, 0], sizes = [1, 8, 128], strides = [1, 1, 1]} : vector<8x8x128xbf16> to vector<1x8x128xbf16>
    %69 = vector.shape_cast %68 : vector<1x8x128xbf16> to vector<8x128xbf16>
    %c2_69 = arith.constant 2 : index
    %c0_70 = arith.constant 0 : index
    %c0_71 = arith.constant 0 : index
    %70 = vector.load %arg6[%c2_69, %c0_70, %c0_71] : memref<8x128x128xbf16, #tpu.memory_space<vmem>>, vector<1x128x128xbf16>
    %71 = vector.shape_cast %70 : vector<1x128x128xbf16> to vector<128x128xbf16>
    %cst_72 = arith.constant dense<0.000000e+00> : vector<8x128xf32>
    %72 = tpu.matmul %69, %71, %cst_72 {dimension_numbers = #tpu.dot_dimension_numbers<[1], [0], [0], [1], [0, 0, 1, 1], [], []>} : vector<8x128xbf16>, vector<128x128xbf16>, vector<8x128xf32> -> vector<8x128xf32>
    %73 = arith.addf %67, %72 : vector<8x128xf32>
    %c0_73 = arith.constant 0 : index
    %c0_74 = arith.constant 0 : index
    %74 = vector.load %arg8[%c0_73, %c0_74] : memref<8x128xf32, #tpu.memory_space<vmem>>, vector<8x128xf32>
    tpu.vector_store %arg8[%c0_73, %c0_74], %73 {strides = array<i32>} : memref<8x128xf32, #tpu.memory_space<vmem>>, vector<8x128xf32>,
    %c0_75 = arith.constant 0 : index
    %c0_76 = arith.constant 0 : index
    %75 = vector.load %arg8[%c0_75, %c0_76] : memref<8x128xf32, #tpu.memory_space<vmem>>, vector<8x128xf32>
    %76 = vector.extract_strided_slice %49 {offsets = [3, 0, 0], sizes = [1, 8, 128], strides = [1, 1, 1]} : vector<8x8x128xbf16> to vector<1x8x128xbf16>
    %77 = vector.shape_cast %76 : vector<1x8x128xbf16> to vector<8x128xbf16>
    %c3 = arith.constant 3 : index
    %c0_77 = arith.constant 0 : index
    %c0_78 = arith.constant 0 : index
    %78 = vector.load %arg6[%c3, %c0_77, %c0_78] : memref<8x128x128xbf16, #tpu.memory_space<vmem>>, vector<1x128x128xbf16>
    %79 = vector.shape_cast %78 : vector<1x128x128xbf16> to vector<128x128xbf16>
    %cst_79 = arith.constant dense<0.000000e+00> : vector<8x128xf32>
    %80 = tpu.matmul %77, %79, %cst_79 {dimension_numbers = #tpu.dot_dimension_numbers<[1], [0], [0], [1], [0, 0, 1, 1], [], []>} : vector<8x128xbf16>, vector<128x128xbf16>, vector<8x128xf32> -> vector<8x128xf32>
    %81 = arith.addf %75, %80 : vector<8x128xf32>
    %c0_80 = arith.constant 0 : index
    %c0_81 = arith.constant 0 : index
    %82 = vector.load %arg8[%c0_80, %c0_81] : memref<8x128xf32, #tpu.memory_space<vmem>>, vector<8x128xf32>
    tpu.vector_store %arg8[%c0_80, %c0_81], %81 {strides = array<i32>} : memref<8x128xf32, #tpu.memory_space<vmem>>, vector<8x128xf32>,
    %c0_82 = arith.constant 0 : index
    %c0_83 = arith.constant 0 : index
    %83 = vector.load %arg8[%c0_82, %c0_83] : memref<8x128xf32, #tpu.memory_space<vmem>>, vector<8x128xf32>
    %84 = vector.extract_strided_slice %49 {offsets = [4, 0, 0], sizes = [1, 8, 128], strides = [1, 1, 1]} : vector<8x8x128xbf16> to vector<1x8x128xbf16>
    %85 = vector.shape_cast %84 : vector<1x8x128xbf16> to vector<8x128xbf16>
    %c4 = arith.constant 4 : index
    %c0_84 = arith.constant 0 : index
    %c0_85 = arith.constant 0 : index
    %86 = vector.load %arg6[%c4, %c0_84, %c0_85] : memref<8x128x128xbf16, #tpu.memory_space<vmem>>, vector<1x128x128xbf16>
    %87 = vector.shape_cast %86 : vector<1x128x128xbf16> to vector<128x128xbf16>
    %cst_86 = arith.constant dense<0.000000e+00> : vector<8x128xf32>
    %88 = tpu.matmul %85, %87, %cst_86 {dimension_numbers = #tpu.dot_dimension_numbers<[1], [0], [0], [1], [0, 0, 1, 1], [], []>} : vector<8x128xbf16>, vector<128x128xbf16>, vector<8x128xf32> -> vector<8x128xf32>
    %89 = arith.addf %83, %88 : vector<8x128xf32>
    %c0_87 = arith.constant 0 : index
    %c0_88 = arith.constant 0 : index
    %90 = vector.load %arg8[%c0_87, %c0_88] : memref<8x128xf32, #tpu.memory_space<vmem>>, vector<8x128xf32>
    tpu.vector_store %arg8[%c0_87, %c0_88], %89 {strides = array<i32>} : memref<8x128xf32, #tpu.memory_space<vmem>>, vector<8x128xf32>,
    %c0_89 = arith.constant 0 : index
    %c0_90 = arith.constant 0 : index
    %91 = vector.load %arg8[%c0_89, %c0_90] : memref<8x128xf32, #tpu.memory_space<vmem>>, vector<8x128xf32>
    %92 = vector.extract_strided_slice %49 {offsets = [5, 0, 0], sizes = [1, 8, 128], strides = [1, 1, 1]} : vector<8x8x128xbf16> to vector<1x8x128xbf16>
    %93 = vector.shape_cast %92 : vector<1x8x128xbf16> to vector<8x128xbf16>
    %c5 = arith.constant 5 : index
    %c0_91 = arith.constant 0 : index
    %c0_92 = arith.constant 0 : index
    %94 = vector.load %arg6[%c5, %c0_91, %c0_92] : memref<8x128x128xbf16, #tpu.memory_space<vmem>>, vector<1x128x128xbf16>
    %95 = vector.shape_cast %94 : vector<1x128x128xbf16> to vector<128x128xbf16>
    %cst_93 = arith.constant dense<0.000000e+00> : vector<8x128xf32>
    %96 = tpu.matmul %93, %95, %cst_93 {dimension_numbers = #tpu.dot_dimension_numbers<[1], [0], [0], [1], [0, 0, 1, 1], [], []>} : vector<8x128xbf16>, vector<128x128xbf16>, vector<8x128xf32> -> vector<8x128xf32>
    %97 = arith.addf %91, %96 : vector<8x128xf32>
    %c0_94 = arith.constant 0 : index
    %c0_95 = arith.constant 0 : index
    %98 = vector.load %arg8[%c0_94, %c0_95] : memref<8x128xf32, #tpu.memory_space<vmem>>, vector<8x128xf32>
    tpu.vector_store %arg8[%c0_94, %c0_95], %97 {strides = array<i32>} : memref<8x128xf32, #tpu.memory_space<vmem>>, vector<8x128xf32>,
    %c0_96 = arith.constant 0 : index
    %c0_97 = arith.constant 0 : index
    %99 = vector.load %arg8[%c0_96, %c0_97] : memref<8x128xf32, #tpu.memory_space<vmem>>, vector<8x128xf32>
    %100 = vector.extract_strided_slice %49 {offsets = [6, 0, 0], sizes = [1, 8, 128], strides = [1, 1, 1]} : vector<8x8x128xbf16> to vector<1x8x128xbf16>
    %101 = vector.shape_cast %100 : vector<1x8x128xbf16> to vector<8x128xbf16>
    %c6 = arith.constant 6 : index
    %c0_98 = arith.constant 0 : index
    %c0_99 = arith.constant 0 : index
    %102 = vector.load %arg6[%c6, %c0_98, %c0_99] : memref<8x128x128xbf16, #tpu.memory_space<vmem>>, vector<1x128x128xbf16>
    %103 = vector.shape_cast %102 : vector<1x128x128xbf16> to vector<128x128xbf16>
    %cst_100 = arith.constant dense<0.000000e+00> : vector<8x128xf32>
    %104 = tpu.matmul %101, %103, %cst_100 {dimension_numbers = #tpu.dot_dimension_numbers<[1], [0], [0], [1], [0, 0, 1, 1], [], []>} : vector<8x128xbf16>, vector<128x128xbf16>, vector<8x128xf32> -> vector<8x128xf32>
    %105 = arith.addf %99, %104 : vector<8x128xf32>
    %c0_101 = arith.constant 0 : index
    %c0_102 = arith.constant 0 : index
    %106 = vector.load %arg8[%c0_101, %c0_102] : memref<8x128xf32, #tpu.memory_space<vmem>>, vector<8x128xf32>
    tpu.vector_store %arg8[%c0_101, %c0_102], %105 {strides = array<i32>} : memref<8x128xf32, #tpu.memory_space<vmem>>, vector<8x128xf32>,
    %c0_103 = arith.constant 0 : index
    %c0_104 = arith.constant 0 : index
    %107 = vector.load %arg8[%c0_103, %c0_104] : memref<8x128xf32, #tpu.memory_space<vmem>>, vector<8x128xf32>
    %108 = vector.extract_strided_slice %49 {offsets = [7, 0, 0], sizes = [1, 8, 128], strides = [1, 1, 1]} : vector<8x8x128xbf16> to vector<1x8x128xbf16>
    %109 = vector.shape_cast %108 : vector<1x8x128xbf16> to vector<8x128xbf16>
    %c7 = arith.constant 7 : index
    %c0_105 = arith.constant 0 : index
    %c0_106 = arith.constant 0 : index
    %110 = vector.load %arg6[%c7, %c0_105, %c0_106] : memref<8x128x128xbf16, #tpu.memory_space<vmem>>, vector<1x128x128xbf16>
    %111 = vector.shape_cast %110 : vector<1x128x128xbf16> to vector<128x128xbf16>
    %cst_107 = arith.constant dense<0.000000e+00> : vector<8x128xf32>
    %112 = tpu.matmul %109, %111, %cst_107 {dimension_numbers = #tpu.dot_dimension_numbers<[1], [0], [0], [1], [0, 0, 1, 1], [], []>} : vector<8x128xbf16>, vector<128x128xbf16>, vector<8x128xf32> -> vector<8x128xf32>
    %113 = arith.addf %107, %112 : vector<8x128xf32>
    %c0_108 = arith.constant 0 : index
    %c0_109 = arith.constant 0 : index
    %114 = vector.load %arg8[%c0_108, %c0_109] : memref<8x128xf32, #tpu.memory_space<vmem>>, vector<8x128xf32>
    tpu.vector_store %arg8[%c0_108, %c0_109], %113 {strides = array<i32>} : memref<8x128xf32, #tpu.memory_space<vmem>>, vector<8x128xf32>,
    return
  }
  func.func @transform_0(%arg0: i32) -> (i32, i32, i32) {
    %c0_i32 = arith.constant 0 : i32
    %c0_i32_0 = arith.constant 0 : i32
    %c0_i32_1 = arith.constant 0 : i32
    return %c0_i32, %arg0, %c0_i32_0 : i32, i32, i32
  }
  func.func @transform_1(%arg0: i32) -> (i32, i32) {
    %c0_i32 = arith.constant 0 : i32
    %c0_i32_0 = arith.constant 0 : i32
    %c0_i32_1 = arith.constant 0 : i32
    return %c0_i32, %c0_i32_0 : i32, i32
  }
  func.func @transform_2(%arg0: i32) -> (i32, i32) {
    %c0_i32 = arith.constant 0 : i32
    %c0_i32_0 = arith.constant 0 : i32
    %c0_i32_1 = arith.constant 0 : i32
    return %c0_i32, %c0_i32_0 : i32, i32
  }
  func.func @transform_3(%arg0: i32) -> (i32, i32, i32) {
    %c0_i32 = arith.constant 0 : i32
    %c0_i32_0 = arith.constant 0 : i32
    %c0_i32_1 = arith.constant 0 : i32
    %c0_i32_2 = arith.constant 0 : i32
    return %c0_i32, %c0_i32_0, %c0_i32_1 : i32, i32, i32
  }
  func.func @transform_4(%arg0: i32) -> (i32, i32) {
    %c0_i32 = arith.constant 0 : i32
    %c0_i32_0 = arith.constant 0 : i32
    %c0_i32_1 = arith.constant 0 : i32
    return %c0_i32, %c0_i32_0 : i32, i32
  }
  func.func @transform_5(%arg0: i32) -> (i32, i32, i32) {
    %c0_i32 = arith.constant 0 : i32
    %c0_i32_0 = arith.constant 0 : i32
    %c0_i32_1 = arith.constant 0 : i32
    %c0_i32_2 = arith.constant 0 : i32
    return %c0_i32, %c0_i32_0, %c0_i32_1 : i32, i32, i32
  }
  func.func @transform_6(%arg0: i32) -> (i32, i32) {
    %c0_i32 = arith.constant 0 : i32
    %c0_i32_0 = arith.constant 0 : i32
    %c0_i32_1 = arith.constant 0 : i32
    return %c0_i32, %c0_i32_0 : i32, i32
  }
  func.func @transform_7(%arg0: i32) -> (i32, i32) {
    %c0_i32 = arith.constant 0 : i32
    %c0_i32_0 = arith.constant 0 : i32
    return %arg0, %c0_i32 : i32, i32
  }
}

</mosaic_0001>

<llo_original>
// kernel: chess_model_forward.1
$region0: #{chess_model_forward.1}
  #allocation0 [shape = 'u32[]', space=smem, size = 0x4, offset = 0x4, fixed_abs, tag = 'smem constant byte address 0x4 - core index']
  #allocation1 [shape = 'u32[144,128]{1,0:T(1,128)}', space=vmem, size = 0x12000, scoped, tag = 'internal scratch']
  #allocation2 [shape = 'bf16[10,8,64]{2,1,0:T(8,128)(2,1)}', space=vmem, size = 0x5000, scoped, tag = 'scratch operand']
  #allocation3 [shape = 'f32[64,128]{1,0:T(8,128)}', space=vmem, size = 0x8000, scoped, tag = 'scratch operand']
  %s0 = inlined_call_operand.vmem [shape: bf16[8,8,96], index: 0, kind: input, shape index: {}]
  %s1 = inlined_call_operand.vmem [shape: bf16[96,64], index: 1, kind: input, shape index: {}]
  %s2 = inlined_call_operand.vmem [shape: f32[1,64], index: 2, kind: input, shape index: {}]
  %s3 = inlined_call_operand.vmem [shape: bf16[3,64,128], index: 3, kind: input, shape index: {}]
  %s4 = inlined_call_operand.vmem [shape: f32[1,128], index: 4, kind: input, shape index: {}]
  %s5 = inlined_call_operand.vmem [shape: bf16[8,128,128], index: 5, kind: input, shape index: {}]
  %s6 = inlined_call_operand.vmem [shape: f32[1,128], index: 6, kind: input, shape index: {}]
  %s7 = inlined_call_operand.vmem [shape: f32[8,128], index: 7, kind: output, shape index: {}]
  %s8 = sld [smem:[#allocation0]]
  $region38: #{chess_model_forward.1} parent=0
    _
  %s10 = ssub.s32 1, %s8
  %s11 = scalar_select 0, %s10, %s8
  // Predicated region
  $region2: #{chess_model_forward.1} parent=0 // pred_check
    _
  $region3: #{chess_model_forward.1} parent=0 // pred_check_branch
    %13 = sbr.rel (0) target = $region5
  $region4: #{chess_model_forward.1} parent=0 // pred_region
    _
  $region5: #{chess_model_forward.1} parent=0 // pred_fallthru
    _
  // Predicated region
  $region6: #{chess_model_forward.1} parent=0 // pred_check
    _
  $region7: #{chess_model_forward.1} parent=0 // pred_check_branch
    %15 = sbr.rel (0) target = $region9
  $region8: #{chess_model_forward.1} parent=0 // pred_region
    _
  $region9: #{chess_model_forward.1} parent=0 // pred_fallthru
    _
  // Predicated region
  $region10: #{chess_model_forward.1} parent=0 // pred_check
    _
  $region11: #{chess_model_forward.1} parent=0 // pred_check_branch
    %17 = sbr.rel (0) target = $region13
  $region12: #{chess_model_forward.1} parent=0 // pred_region
    _
  $region13: #{chess_model_forward.1} parent=0 // pred_fallthru
    _
  // Predicated region
  $region14: #{chess_model_forward.1} parent=0 // pred_check
    _
  $region15: #{chess_model_forward.1} parent=0 // pred_check_branch
    %19 = sbr.rel (0) target = $region17
  $region16: #{chess_model_forward.1} parent=0 // pred_region
    _
  $region17: #{chess_model_forward.1} parent=0 // pred_fallthru
    _
  // Predicated region
  $region18: #{chess_model_forward.1} parent=0 // pred_check
    _
  $region19: #{chess_model_forward.1} parent=0 // pred_check_branch
    %21 = sbr.rel (0) target = $region21
  $region20: #{chess_model_forward.1} parent=0 // pred_region
    _
  $region21: #{chess_model_forward.1} parent=0 // pred_fallthru
    _
  // Predicated region
  $region22: #{chess_model_forward.1} parent=0 // pred_check
    _
  $region23: #{chess_model_forward.1} parent=0 // pred_check_branch
    %23 = sbr.rel (0) target = $region25
  $region24: #{chess_model_forward.1} parent=0 // pred_region
    _
  $region25: #{chess_model_forward.1} parent=0 // pred_fallthru
    _
  // Predicated region
  $region26: #{chess_model_forward.1} parent=0 // pred_check
    _
  $region27: #{chess_model_forward.1} parent=0 // pred_check_branch
    %25 = sbr.rel (0) target = $region29
  $region28: #{chess_model_forward.1} parent=0 // pred_region
    _
  $region29: #{chess_model_forward.1} parent=0 // pred_fallthru
    _
  %v27 = vld [vmem:[%s0] sm:$0xf]
  %v28 = vld [vmem:[%s0 + $0x4] sm:$0xf]
  %v29 = vld [vmem:[%s0 + $0x8] sm:$0xf]
  %v30 = vld [vmem:[%s0 + $0xc] sm:$0xf]
  %v31 = vld [vmem:[%s0 + $0x10] sm:$0xf]
  %v32 = vld [vmem:[%s0 + $0x14] sm:$0xf]
  %v33 = vld [vmem:[%s0 + $0x18] sm:$0xf]
  %v34 = vld [vmem:[%s0 + $0x1c] sm:$0xf]
  %v35 = vld [vmem:[%s1] sm:$0xf]
  %v36 = vld [vmem:[%s1 + $0x4] sm:$0xf]
  %v37 = vld [vmem:[%s1 + $0x8] sm:$0xf]
  %v38 = vld [vmem:[%s1 + $0xc] sm:$0xf]
  %v39 = vld [vmem:[%s1 + $0x10] sm:$0xf]
  %v40 = vld [vmem:[%s1 + $0x14] sm:$0xf]
  %v41 = vld [vmem:[%s1 + $0x18] sm:$0xf]
  %v42 = vld [vmem:[%s1 + $0x1c] sm:$0xf]
  %v43 = vld [vmem:[%s1 + $0x20] sm:$0xf]
  %v44 = vld [vmem:[%s1 + $0x24] sm:$0xf]
  %v45 = vld [vmem:[%s1 + $0x28] sm:$0xf]
  %v46 = vld [vmem:[%s1 + $0x2c] sm:$0xf]
  %v47 = vld [vmem:[%s2] sm:$0x1]
  %v49 = vlaneseq
  %v50 = vshrl.u32 %v49, 7
  %v51 = vsub.s32 0, %v50
  %v52 = vrot.slane %v47, %v51
  %v62 = vunpack.c.l.b16 %v27
  %v63 = vunpack.c.l.b16 %v28
  %v64 = vunpack.c.l.b16 %v29
  %v65 = vunpack.c.l.b16 %v30
  %v66 = vunpack.c.l.b16 %v31
  %v67 = vunpack.c.l.b16 %v32
  %v68 = vunpack.c.l.b16 %v33
  %v69 = vunpack.c.l.b16 %v34
  %v70 = vpack.c.b16 %v63, %v62
  %v71 = vpack.c.b16 %v65, %v64
  %v72 = vpack.c.b16 %v67, %v66
  %v73 = vpack.c.b16 %v69, %v68
  %v86 = vunpack.c.l.b16 %v35
  %v87 = vunpack.c.l.b16 %v36
  %v88 = vunpack.c.l.b16 %v37
  %v89 = vunpack.c.l.b16 %v38
  %v90 = vunpack.c.l.b16 %v39
  %v91 = vunpack.c.l.b16 %v40
  %v92 = vunpack.c.l.b16 %v41
  %v93 = vunpack.c.l.b16 %v42
  %v94 = vunpack.c.l.b16 %v43
  %v95 = vunpack.c.l.b16 %v44
  %v96 = vunpack.c.l.b16 %v45
  %v97 = vunpack.c.l.b16 %v46
  %v98 = vpack.c.b16 %v87, %v86
  %v99 = vpack.c.b16 %v89, %v88
  %v100 = vpack.c.b16 %v91, %v90
  %v101 = vpack.c.b16 %v93, %v92
  %v102 = vpack.c.b16 %v95, %v94
  %v103 = vpack.c.b16 %v97, %v96
  %vm110 = vcmask 785408
  %v112 = vsel %vm110, %v70, 0
  %v115 = vsel %vm110, %v71, 0
  %v118 = vsel %vm110, %v72, 0
  %v121 = vsel %vm110, %v73, 0
  %123 = vmatprep.subr.bf16.mxu0 0
  %124 = vmatpush1.bf16.msra.mxu0 %v98
  %125 = vmatprep.subr.bf16.mxu0 0
  %126 = vmatpush1.bf16.msra.mxu0 %v99
  %127 = vmatprep.subr.bf16.mxu0 0
  %128 = vmatpush1.bf16.msra.mxu0 %v100
  %129 = vmatprep.subr.bf16.mxu0 0
  %130 = vmatpush1.bf16.msra.mxu0 %v101
  %131 = vmatprep.subr.bf16.mxu0 0
  %132 = vmatpush1.bf16.msra.mxu0 %v102
  %133 = vmatprep.subr.bf16.mxu0 0
  %134 = vmatpush1.bf16.msra.mxu0 %v103
  %135 = vmatprep.subr.bf16.mxu0 0
  %136 = vmatpush1.bf16.msra.mxu0 0
  %137 = vmatprep.subr.bf16.mxu0 0
  %138 = vmatpush1.bf16.msra.mxu0 0
  %139 = vmatprep.subr.bf16.mxu0 0
  %140 = vmatpush1.bf16.msra.mxu0 0
  %141 = vmatprep.subr.bf16.mxu0 0
  %142 = vmatpush1.bf16.msra.mxu0 0
  %143 = vmatprep.subr.bf16.mxu0 0
  %144 = vmatpush1.bf16.msra.mxu0 0
  %145 = vmatprep.subr.bf16.mxu0 0
  %146 = vmatpush1.bf16.msra.mxu0 0
  %147 = vmatprep.subr.bf16.mxu0 0
  %148 = vmatpush1.bf16.msra.mxu0 0
  %149 = vmatprep.subr.bf16.mxu0 0
  %150 = vmatpush1.bf16.msra.mxu0 0
  %151 = vmatprep.subr.bf16.mxu0 0
  %152 = vmatpush1.bf16.msra.mxu0 0
  %153 = vmatprep.subr.bf16.mxu0 0
  %154 = vmatpush1.bf16.msra.mxu0 0
  %155 = vmatprep.mubr.bf16.mxu0 0
  %156 = vmatmul.mubr.bf16.gmra.mrb[0].mxu0 %v112
  %v157 = vpop.f32.mrb[0].mxu0
  %v158 = vadd.f32 %v52, %v157
  %v159 = vpop.f32.mrb[0].mxu0
  %v160 = vpop.f32.mrb[0].mxu0
  %v161 = vadd.f32 %v52, %v160
  %v162 = vpop.f32.mrb[0].mxu0
  %163 = vmatprep.mubr.bf16.mxu0 0
  %164 = vmatmul.mubr.bf16.gmra.mrb[0].mxu0 %v115
  %v165 = vpop.f32.mrb[0].mxu0
  %v166 = vadd.f32 %v52, %v165
  %v167 = vpop.f32.mrb[0].mxu0
  %v168 = vpop.f32.mrb[0].mxu0
  %v169 = vadd.f32 %v52, %v168
  %v170 = vpop.f32.mrb[0].mxu0
  %171 = vmatprep.mubr.bf16.mxu0 0
  %172 = vmatmul.mubr.bf16.gmra.mrb[0].mxu0 %v118
  %v173 = vpop.f32.mrb[0].mxu0
  %v174 = vadd.f32 %v52, %v173
  %v175 = vpop.f32.mrb[0].mxu0
  %v176 = vpop.f32.mrb[0].mxu0
  %v177 = vadd.f32 %v52, %v176
  %v178 = vpop.f32.mrb[0].mxu0
  %179 = vmatprep.mubr.bf16.mxu0 0
  %180 = vmatmul.mubr.bf16.gmra.mrb[0].mxu0 %v121
  %v181 = vpop.f32.mrb[0].mxu0
  %v182 = vadd.f32 %v52, %v181
  %v183 = vpop.f32.mrb[0].mxu0
  %v184 = vpop.f32.mrb[0].mxu0
  %v185 = vadd.f32 %v52, %v184
  %v186 = vpop.f32.mrb[0].mxu0
  %187 = vdwg.mxu0
  %v188 = vmax.f32 %v158, 0.0
  %v189 = vmax.f32 %v161, 0.0
  %v190 = vmax.f32 %v166, 0.0
  %v191 = vmax.f32 %v169, 0.0
  %v192 = vmax.f32 %v174, 0.0
  %v193 = vmax.f32 %v177, 0.0
  %v194 = vmax.f32 %v182, 0.0
  %v195 = vmax.f32 %v185, 0.0
  %v196 = vpack.c.bf16 %v189, %v188
  %v197 = vpack.c.bf16 %v191, %v190
  %v198 = vpack.c.bf16 %v193, %v192
  %v199 = vpack.c.bf16 %v195, %v194
  %vm200 = vcmask 519168
  %201 = vst.msk [vmem:[#allocation2] sm:$0xf] %vm200, 0
  %s202 = scalar_lea.vmem [#allocation2], 36
  %203 = vst.msk [vmem:[%s202] sm:$0xf] %vm200, 0
  %v208 = vunpack.c.l.b16 %v196
  %v209 = vunpack.c.h.b16 %v196
  %v210 = vunpack.c.l.b16 %v197
  %v211 = vunpack.c.h.b16 %v197
  %v212 = vunpack.c.l.b16 %v198
  %v213 = vunpack.c.h.b16 %v198
  %v214 = vunpack.c.l.b16 %v199
  %v215 = vunpack.c.h.b16 %v199
  %v216 = vpack.c.b16 %v208, %v208
  %v217 = vpack.c.b16 %v209, %v209
  %v218 = vpack.c.b16 %v210, %v210
  %v219 = vpack.c.b16 %v211, %v211
  %v220 = vpack.c.b16 %v212, %v212
  %v221 = vpack.c.b16 %v213, %v213
  %v222 = vpack.c.b16 %v214, %v214
  %v223 = vpack.c.b16 %v215, %v215
  %s232 = scalar_lea.vmem [#allocation2], 4
  %233 = vst.msk [vmem:[%s232] sm:$0xf] %vm200, %v216
  %234 = vst.msk [vmem:[%s232 + $0x4] sm:$0xf] %vm200, %v217
  %235 = vst.msk [vmem:[%s232 + $0x8] sm:$0xf] %vm200, %v218
  %236 = vst.msk [vmem:[%s232 + $0xc] sm:$0xf] %vm200, %v219
  %237 = vst.msk [vmem:[%s232 + $0x10] sm:$0xf] %vm200, %v220
  %238 = vst.msk [vmem:[%s232 + $0x14] sm:$0xf] %vm200, %v221
  %239 = vst.msk [vmem:[%s232 + $0x18] sm:$0xf] %vm200, %v222
  %240 = vst.msk [vmem:[%s232 + $0x1c] sm:$0xf] %vm200, %v223
  %v241 = vld [vmem:[#allocation2] sm:$0xf]
  %v242 = vld [vmem:[#allocation2 + $0x4] sm:$0xf]
  %v243 = vld [vmem:[#allocation2 + $0x8] sm:$0xf]
  %v244 = vld [vmem:[#allocation2 + $0xc] sm:$0xf]
  %v245 = vld [vmem:[#allocation2 + $0x10] sm:$0xf]
  %v246 = vld [vmem:[#allocation2 + $0x14] sm:$0xf]
  %v247 = vld [vmem:[#allocation2 + $0x18] sm:$0xf]
  %v248 = vld [vmem:[#allocation2 + $0x1c] sm:$0xf]
  %v249 = vld [vmem:[%s3] sm:$0xf]
  %v250 = vld [vmem:[%s3 + $0x4] sm:$0xf]
  %v251 = vld [vmem:[%s3 + $0x8] sm:$0xf]
  %v252 = vld [vmem:[%s3 + $0xc] sm:$0xf]
  %v253 = vld [vmem:[%s3 + $0x10] sm:$0xf]
  %v254 = vld [vmem:[%s3 + $0x14] sm:$0xf]
  %v255 = vld [vmem:[%s3 + $0x18] sm:$0xf]
  %v256 = vld [vmem:[%s3 + $0x1c] sm:$0xf]
  %v265 = vunpack.c.l.b16 %v241
  %v266 = vunpack.c.l.b16 %v242
  %v267 = vunpack.c.l.b16 %v243
  %v268 = vunpack.c.l.b16 %v244
  %v269 = vunpack.c.l.b16 %v245
  %v270 = vunpack.c.l.b16 %v246
  %v271 = vunpack.c.l.b16 %v247
  %v272 = vunpack.c.l.b16 %v248
  %v273 = vpack.c.b16 %v266, %v265
  %v274 = vpack.c.b16 %v268, %v267
  %v275 = vpack.c.b16 %v270, %v269
  %v276 = vpack.c.b16 %v272, %v271
  %v285 = vunpack.c.l.b16 %v249
  %v286 = vunpack.c.l.b16 %v250
  %v287 = vunpack.c.l.b16 %v251
  %v288 = vunpack.c.l.b16 %v252
  %v289 = vunpack.c.l.b16 %v253
  %v290 = vunpack.c.l.b16 %v254
  %v291 = vunpack.c.l.b16 %v255
  %v292 = vunpack.c.l.b16 %v256
  %v293 = vpack.c.b16 %v286, %v285
  %v294 = vpack.c.b16 %v288, %v287
  %v295 = vpack.c.b16 %v290, %v289
  %v296 = vpack.c.b16 %v292, %v291
  %vm301 = vcmask 523264
  %v303 = vsel %vm301, %v273, 0
  %v306 = vsel %vm301, %v274, 0
  %v309 = vsel %vm301, %v275, 0
  %v312 = vsel %vm301, %v276, 0
  %314 = vmatprep.subr.bf16.mxu0 0
  %315 = vmatpush1.bf16.msra.mxu0 %v293
  %316 = vmatprep.subr.bf16.mxu0 0
  %317 = vmatpush1.bf16.msra.mxu0 %v294
  %318 = vmatprep.subr.bf16.mxu0 0
  %319 = vmatpush1.bf16.msra.mxu0 %v295
  %320 = vmatprep.subr.bf16.mxu0 0
  %321 = vmatpush1.bf16.msra.mxu0 %v296
  %322 = vmatprep.subr.bf16.mxu0 0
  %323 = vmatpush1.bf16.msra.mxu0 0
  %324 = vmatprep.subr.bf16.mxu0 0
  %325 = vmatpush1.bf16.msra.mxu0 0
  %326 = vmatprep.subr.bf16.mxu0 0
  %327 = vmatpush1.bf16.msra.mxu0 0
  %328 = vmatprep.subr.bf16.mxu0 0
  %329 = vmatpush1.bf16.msra.mxu0 0
  %330 = vmatprep.subr.bf16.mxu0 0
  %331 = vmatpush1.bf16.msra.mxu0 0
  %332 = vmatprep.subr.bf16.mxu0 0
  %333 = vmatpush1.bf16.msra.mxu0 0
  %334 = vmatprep.subr.bf16.mxu0 0
  %335 = vmatpush1.bf16.msra.mxu0 0
  %336 = vmatprep.subr.bf16.mxu0 0
  %337 = vmatpush1.bf16.msra.mxu0 0
  %338 = vmatprep.subr.bf16.mxu0 0
  %339 = vmatpush1.bf16.msra.mxu0 0
  %340 = vmatprep.subr.bf16.mxu0 0
  %341 = vmatpush1.bf16.msra.mxu0 0
  %342 = vmatprep.subr.bf16.mxu0 0
  %343 = vmatpush1.bf16.msra.mxu0 0
  %344 = vmatprep.subr.bf16.mxu0 0
  %345 = vmatpush1.bf16.msra.mxu0 0
  %346 = vmatprep.mubr.bf16.mxu0 0
  %347 = vmatmul.mubr.bf16.gmra.mrb[0].mxu0 %v303
  %v348 = vpop.f32.mrb[0].mxu0
  %v349 = vadd.f32 0.0, %v348
  %v350 = vpop.f32.mrb[0].mxu0
  %v351 = vpop.f32.mrb[0].mxu0
  %v352 = vadd.f32 0.0, %v351
  %v353 = vpop.f32.mrb[0].mxu0
  %354 = vmatprep.mubr.bf16.mxu0 0
  %355 = vmatmul.mubr.bf16.gmra.mrb[0].mxu0 %v306
  %v356 = vpop.f32.mrb[0].mxu0
  %v357 = vadd.f32 0.0, %v356
  %v358 = vpop.f32.mrb[0].mxu0
  %v359 = vpop.f32.mrb[0].mxu0
  %v360 = vadd.f32 0.0, %v359
  %v361 = vpop.f32.mrb[0].mxu0
  %362 = vmatprep.mubr.bf16.mxu0 0
  %363 = vmatmul.mubr.bf16.gmra.mrb[0].mxu0 %v309
  %v364 = vpop.f32.mrb[0].mxu0
  %v365 = vadd.f32 0.0, %v364
  %v366 = vpop.f32.mrb[0].mxu0
  %v367 = vpop.f32.mrb[0].mxu0
  %v368 = vadd.f32 0.0, %v367
  %v369 = vpop.f32.mrb[0].mxu0
  %370 = vmatprep.mubr.bf16.mxu0 0
  %371 = vmatmul.mubr.bf16.gmra.mrb[0].mxu0 %v312
  %v372 = vpop.f32.mrb[0].mxu0
  %v373 = vadd.f32 0.0, %v372
  %v374 = vpop.f32.mrb[0].mxu0
  %v375 = vpop.f32.mrb[0].mxu0
  %v376 = vadd.f32 0.0, %v375
  %v377 = vpop.f32.mrb[0].mxu0
  %378 = vdwg.mxu0
  %379 = vst [vmem:[#allocation3] sm:$0xff] %v349
  %380 = vst [vmem:[#allocation3 + $0x8] sm:$0xff] %v352
  %381 = vst [vmem:[#allocation3 + $0x10] sm:$0xff] %v357
  %382 = vst [vmem:[#allocation3 + $0x18] sm:$0xff] %v360
  %383 = vst [vmem:[#allocation3 + $0x20] sm:$0xff] %v365
  %384 = vst [vmem:[#allocation3 + $0x28] sm:$0xff] %v368
  %385 = vst [vmem:[#allocation3 + $0x30] sm:$0xff] %v373
  %386 = vst [vmem:[#allocation3 + $0x38] sm:$0xff] %v376
  %v387 = vld [vmem:[#allocation3] sm:$0xff]
  %v388 = vld [vmem:[#allocation3 + $0x8] sm:$0xff]
  %v389 = vld [vmem:[#allocation3 + $0x10] sm:$0xff]
  %v390 = vld [vmem:[#allocation3 + $0x18] sm:$0xff]
  %v391 = vld [vmem:[#allocation3 + $0x20] sm:$0xff]
  %v392 = vld [vmem:[#allocation3 + $0x28] sm:$0xff]
  %v393 = vld [vmem:[#allocation3 + $0x30] sm:$0xff]
  %v394 = vld [vmem:[#allocation3 + $0x38] sm:$0xff]
  %v395 = vld [vmem:[%s232] sm:$0xf]
  %v396 = vld [vmem:[%s232 + $0x4] sm:$0xf]
  %v397 = vld [vmem:[%s232 + $0x8] sm:$0xf]
  %v398 = vld [vmem:[%s232 + $0xc] sm:$0xf]
  %v399 = vld [vmem:[%s232 + $0x10] sm:$0xf]
  %v400 = vld [vmem:[%s232 + $0x14] sm:$0xf]
  %v401 = vld [vmem:[%s232 + $0x18] sm:$0xf]
  %v402 = vld [vmem:[%s232 + $0x1c] sm:$0xf]
  %s403 = scalar_lea.vmem %s3, 32
  %v404 = vld [vmem:[%s403] sm:$0xf]
  %v405 = vld [vmem:[%s403 + $0x4] sm:$0xf]
  %v406 = vld [vmem:[%s403 + $0x8] sm:$0xf]
  %v407 = vld [vmem:[%s403 + $0xc] sm:$0xf]
  %v408 = vld [vmem:[%s403 + $0x10] sm:$0xf]
  %v409 = vld [vmem:[%s403 + $0x14] sm:$0xf]
  %v410 = vld [vmem:[%s403 + $0x18] sm:$0xf]
  %v411 = vld [vmem:[%s403 + $0x1c] sm:$0xf]
  %v420 = vunpack.c.l.b16 %v395
  %v421 = vunpack.c.l.b16 %v396
  %v422 = vunpack.c.l.b16 %v397
  %v423 = vunpack.c.l.b16 %v398
  %v424 = vunpack.c.l.b16 %v399
  %v425 = vunpack.c.l.b16 %v400
  %v426 = vunpack.c.l.b16 %v401
  %v427 = vunpack.c.l.b16 %v402
  %v428 = vpack.c.b16 %v421, %v420
  %v429 = vpack.c.b16 %v423, %v422
  %v430 = vpack.c.b16 %v425, %v424
  %v431 = vpack.c.b16 %v427, %v426
  %v440 = vunpack.c.l.b16 %v404
  %v441 = vunpack.c.l.b16 %v405
  %v442 = vunpack.c.l.b16 %v406
  %v443 = vunpack.c.l.b16 %v407
  %v444 = vunpack.c.l.b16 %v408
  %v445 = vunpack.c.l.b16 %v409
  %v446 = vunpack.c.l.b16 %v410
  %v447 = vunpack.c.l.b16 %v411
  %v448 = vpack.c.b16 %v441, %v440
  %v449 = vpack.c.b16 %v443, %v442
  %v450 = vpack.c.b16 %v445, %v444
  %v451 = vpack.c.b16 %v447, %v446
  %v457 = vsel %vm301, %v428, 0
  %v460 = vsel %vm301, %v429, 0
  %v463 = vsel %vm301, %v430, 0
  %v466 = vsel %vm301, %v431, 0
  %468 = vmatprep.subr.bf16.mxu0 0
  %469 = vmatpush1.bf16.msra.mxu0 %v448
  %470 = vmatprep.subr.bf16.mxu0 0
  %471 = vmatpush1.bf16.msra.mxu0 %v449
  %472 = vmatprep.subr.bf16.mxu0 0
  %473 = vmatpush1.bf16.msra.mxu0 %v450
  %474 = vmatprep.subr.bf16.mxu0 0
  %475 = vmatpush1.bf16.msra.mxu0 %v451
  %476 = vmatprep.subr.bf16.mxu0 0
  %477 = vmatpush1.bf16.msra.mxu0 0
  %478 = vmatprep.subr.bf16.mxu0 0
  %479 = vmatpush1.bf16.msra.mxu0 0
  %480 = vmatprep.subr.bf16.mxu0 0
  %481 = vmatpush1.bf16.msra.mxu0 0
  %482 = vmatprep.subr.bf16.mxu0 0
  %483 = vmatpush1.bf16.msra.mxu0 0
  %484 = vmatprep.subr.bf16.mxu0 0
  %485 = vmatpush1.bf16.msra.mxu0 0
  %486 = vmatprep.subr.bf16.mxu0 0
  %487 = vmatpush1.bf16.msra.mxu0 0
  %488 = vmatprep.subr.bf16.mxu0 0
  %489 = vmatpush1.bf16.msra.mxu0 0
  %490 = vmatprep.subr.bf16.mxu0 0
  %491 = vmatpush1.bf16.msra.mxu0 0
  %492 = vmatprep.subr.bf16.mxu0 0
  %493 = vmatpush1.bf16.msra.mxu0 0
  %494 = vmatprep.subr.bf16.mxu0 0
  %495 = vmatpush1.bf16.msra.mxu0 0
  %496 = vmatprep.subr.bf16.mxu0 0
  %497 = vmatpush1.bf16.msra.mxu0 0
  %498 = vmatprep.subr.bf16.mxu0 0
  %499 = vmatpush1.bf16.msra.mxu0 0
  %500 = vmatprep.mubr.bf16.mxu0 0
  %501 = vmatmul.mubr.bf16.gmra.mrb[0].mxu0 %v457
  %v502 = vpop.f32.mrb[0].mxu0
  %v503 = vadd.f32 0.0, %v502
  %v504 = vpop.f32.mrb[0].mxu0
  %v505 = vpop.f32.mrb[0].mxu0
  %v506 = vadd.f32 0.0, %v505
  %v507 = vpop.f32.mrb[0].mxu0
  %508 = vmatprep.mubr.bf16.mxu0 0
  %509 = vmatmul.mubr.bf16.gmra.mrb[0].mxu0 %v460
  %v510 = vpop.f32.mrb[0].mxu0
  %v511 = vadd.f32 0.0, %v510
  %v512 = vpop.f32.mrb[0].mxu0
  %v513 = vpop.f32.mrb[0].mxu0
  %v514 = vadd.f32 0.0, %v513
  %v515 = vpop.f32.mrb[0].mxu0
  %516 = vmatprep.mubr.bf16.mxu0 0
  %517 = vmatmul.mubr.bf16.gmra.mrb[0].mxu0 %v463
  %v518 = vpop.f32.mrb[0].mxu0
  %v519 = vadd.f32 0.0, %v518
  %v520 = vpop.f32.mrb[0].mxu0
  %v521 = vpop.f32.mrb[0].mxu0
  %v522 = vadd.f32 0.0, %v521
  %v523 = vpop.f32.mrb[0].mxu0
  %524 = vmatprep.mubr.bf16.mxu0 0
  %525 = vmatmul.mubr.bf16.gmra.mrb[0].mxu0 %v466
  %v526 = vpop.f32.mrb[0].mxu0
  %v527 = vadd.f32 0.0, %v526
  %v528 = vpop.f32.mrb[0].mxu0
  %v529 = vpop.f32.mrb[0].mxu0
  %v530 = vadd.f32 0.0, %v529
  %v531 = vpop.f32.mrb[0].mxu0
  %532 = vdwg.mxu0
  %v533 = vadd.f32 %v387, %v503
  %v534 = vadd.f32 %v388, %v506
  %v535 = vadd.f32 %v389, %v511
  %v536 = vadd.f32 %v390, %v514
  %v537 = vadd.f32 %v391, %v519
  %v538 = vadd.f32 %v392, %v522
  %v539 = vadd.f32 %v393, %v527
  %v540 = vadd.f32 %v394, %v530
  %541 = vst [vmem:[#allocation3] sm:$0xff] %v533
  %542 = vst [vmem:[#allocation3 + $0x8] sm:$0xff] %v534
  %543 = vst [vmem:[#allocation3 + $0x10] sm:$0xff] %v535
  %544 = vst [vmem:[#allocation3 + $0x18] sm:$0xff] %v536
  %545 = vst [vmem:[#allocation3 + $0x20] sm:$0xff] %v537
  %546 = vst [vmem:[#allocation3 + $0x28] sm:$0xff] %v538
  %547 = vst [vmem:[#allocation3 + $0x30] sm:$0xff] %v539
  %548 = vst [vmem:[#allocation3 + $0x38] sm:$0xff] %v540
  %v549 = vld [vmem:[#allocation3] sm:$0xff]
  %v550 = vld [vmem:[#allocation3 + $0x8] sm:$0xff]
  %v551 = vld [vmem:[#allocation3 + $0x10] sm:$0xff]
  %v552 = vld [vmem:[#allocation3 + $0x18] sm:$0xff]
  %v553 = vld [vmem:[#allocation3 + $0x20] sm:$0xff]
  %v554 = vld [vmem:[#allocation3 + $0x28] sm:$0xff]
  %v555 = vld [vmem:[#allocation3 + $0x30] sm:$0xff]
  %v556 = vld [vmem:[#allocation3 + $0x38] sm:$0xff]
  %s557 = scalar_lea.vmem [#allocation2], 8
  %v558 = vld [vmem:[%s557] sm:$0xf]
  %v559 = vld [vmem:[%s557 + $0x4] sm:$0xf]
  %v560 = vld [vmem:[%s557 + $0x8] sm:$0xf]
  %v561 = vld [vmem:[%s557 + $0xc] sm:$0xf]
  %v562 = vld [vmem:[%s557 + $0x10] sm:$0xf]
  %v563 = vld [vmem:[%s557 + $0x14] sm:$0xf]
  %v564 = vld [vmem:[%s557 + $0x18] sm:$0xf]
  %v565 = vld [vmem:[%s557 + $0x1c] sm:$0xf]
  %s566 = scalar_lea.vmem %s3, 64
  %v567 = vld [vmem:[%s566] sm:$0xf]
  %v568 = vld [vmem:[%s566 + $0x4] sm:$0xf]
  %v569 = vld [vmem:[%s566 + $0x8] sm:$0xf]
  %v570 = vld [vmem:[%s566 + $0xc] sm:$0xf]
  %v571 = vld [vmem:[%s566 + $0x10] sm:$0xf]
  %v572 = vld [vmem:[%s566 + $0x14] sm:$0xf]
  %v573 = vld [vmem:[%s566 + $0x18] sm:$0xf]
  %v574 = vld [vmem:[%s566 + $0x1c] sm:$0xf]
  %v583 = vunpack.c.l.b16 %v558
  %v584 = vunpack.c.l.b16 %v559
  %v585 = vunpack.c.l.b16 %v560
  %v586 = vunpack.c.l.b16 %v561
  %v587 = vunpack.c.l.b16 %v562
  %v588 = vunpack.c.l.b16 %v563
  %v589 = vunpack.c.l.b16 %v564
  %v590 = vunpack.c.l.b16 %v565
  %v591 = vpack.c.b16 %v584, %v583
  %v592 = vpack.c.b16 %v586, %v585
  %v593 = vpack.c.b16 %v588, %v587
  %v594 = vpack.c.b16 %v590, %v589
  %v603 = vunpack.c.l.b16 %v567
  %v604 = vunpack.c.l.b16 %v568
  %v605 = vunpack.c.l.b16 %v569
  %v606 = vunpack.c.l.b16 %v570
  %v607 = vunpack.c.l.b16 %v571
  %v608 = vunpack.c.l.b16 %v572
  %v609 = vunpack.c.l.b16 %v573
  %v610 = vunpack.c.l.b16 %v574
  %v611 = vpack.c.b16 %v604, %v603
  %v612 = vpack.c.b16 %v606, %v605
  %v613 = vpack.c.b16 %v608, %v607
  %v614 = vpack.c.b16 %v610, %v609
  %v620 = vsel %vm301, %v591, 0
  %v623 = vsel %vm301, %v592, 0
  %v626 = vsel %vm301, %v593, 0
  %v629 = vsel %vm301, %v594, 0
  %631 = vmatprep.subr.bf16.mxu0 0
  %632 = vmatpush1.bf16.msra.mxu0 %v611
  %633 = vmatprep.subr.bf16.mxu0 0
  %634 = vmatpush1.bf16.msra.mxu0 %v612
  %635 = vmatprep.subr.bf16.mxu0 0
  %636 = vmatpush1.bf16.msra.mxu0 %v613
  %637 = vmatprep.subr.bf16.mxu0 0
  %638 = vmatpush1.bf16.msra.mxu0 %v614
  %639 = vmatprep.subr.bf16.mxu0 0
  %640 = vmatpush1.bf16.msra.mxu0 0
  %641 = vmatprep.subr.bf16.mxu0 0
  %642 = vmatpush1.bf16.msra.mxu0 0
  %643 = vmatprep.subr.bf16.mxu0 0
  %644 = vmatpush1.bf16.msra.mxu0 0
  %645 = vmatprep.subr.bf16.mxu0 0
  %646 = vmatpush1.bf16.msra.mxu0 0
  %647 = vmatprep.subr.bf16.mxu0 0
  %648 = vmatpush1.bf16.msra.mxu0 0
  %649 = vmatprep.subr.bf16.mxu0 0
  %650 = vmatpush1.bf16.msra.mxu0 0
  %651 = vmatprep.subr.bf16.mxu0 0
  %652 = vmatpush1.bf16.msra.mxu0 0
  %653 = vmatprep.subr.bf16.mxu0 0
  %654 = vmatpush1.bf16.msra.mxu0 0
  %655 = vmatprep.subr.bf16.mxu0 0
  %656 = vmatpush1.bf16.msra.mxu0 0
  %657 = vmatprep.subr.bf16.mxu0 0
  %658 = vmatpush1.bf16.msra.mxu0 0
  %659 = vmatprep.subr.bf16.mxu0 0
  %660 = vmatpush1.bf16.msra.mxu0 0
  %661 = vmatprep.subr.bf16.mxu0 0
  %662 = vmatpush1.bf16.msra.mxu0 0
  %663 = vmatprep.mubr.bf16.mxu0 0
  %664 = vmatmul.mubr.bf16.gmra.mrb[0].mxu0 %v620
  %v665 = vpop.f32.mrb[0].mxu0
  %v666 = vadd.f32 0.0, %v665
  %v667 = vpop.f32.mrb[0].mxu0
  %v668 = vpop.f32.mrb[0].mxu0
  %v669 = vadd.f32 0.0, %v668
  %v670 = vpop.f32.mrb[0].mxu0
  %671 = vmatprep.mubr.bf16.mxu0 0
  %672 = vmatmul.mubr.bf16.gmra.mrb[0].mxu0 %v623
  %v673 = vpop.f32.mrb[0].mxu0
  %v674 = vadd.f32 0.0, %v673
  %v675 = vpop.f32.mrb[0].mxu0
  %v676 = vpop.f32.mrb[0].mxu0
  %v677 = vadd.f32 0.0, %v676
  %v678 = vpop.f32.mrb[0].mxu0
  %679 = vmatprep.mubr.bf16.mxu0 0
  %680 = vmatmul.mubr.bf16.gmra.mrb[0].mxu0 %v626
  %v681 = vpop.f32.mrb[0].mxu0
  %v682 = vadd.f32 0.0, %v681
  %v683 = vpop.f32.mrb[0].mxu0
  %v684 = vpop.f32.mrb[0].mxu0
  %v685 = vadd.f32 0.0, %v684
  %v686 = vpop.f32.mrb[0].mxu0
  %687 = vmatprep.mubr.bf16.mxu0 0
  %688 = vmatmul.mubr.bf16.gmra.mrb[0].mxu0 %v629
  %v689 = vpop.f32.mrb[0].mxu0
  %v690 = vadd.f32 0.0, %v689
  %v691 = vpop.f32.mrb[0].mxu0
  %v692 = vpop.f32.mrb[0].mxu0
  %v693 = vadd.f32 0.0, %v692
  %v694 = vpop.f32.mrb[0].mxu0
  %695 = vdwg.mxu0
  %v696 = vadd.f32 %v549, %v666
  %v697 = vadd.f32 %v550, %v669
  %v698 = vadd.f32 %v551, %v674
  %v699 = vadd.f32 %v552, %v677
  %v700 = vadd.f32 %v553, %v682
  %v701 = vadd.f32 %v554, %v685
  %v702 = vadd.f32 %v555, %v690
  %v703 = vadd.f32 %v556, %v693
  %704 = vst [vmem:[#allocation3] sm:$0xff] %v696
  %705 = vst [vmem:[#allocation3 + $0x8] sm:$0xff] %v697
  %706 = vst [vmem:[#allocation3 + $0x10] sm:$0xff] %v698
  %707 = vst [vmem:[#allocation3 + $0x18] sm:$0xff] %v699
  %708 = vst [vmem:[#allocation3 + $0x20] sm:$0xff] %v700
  %709 = vst [vmem:[#allocation3 + $0x28] sm:$0xff] %v701
  %710 = vst [vmem:[#allocation3 + $0x30] sm:$0xff] %v702
  %711 = vst [vmem:[#allocation3 + $0x38] sm:$0xff] %v703
  %v712 = vld [vmem:[#allocation3] sm:$0xff]
  %v713 = vld [vmem:[#allocation3 + $0x8] sm:$0xff]
  %v714 = vld [vmem:[#allocation3 + $0x10] sm:$0xff]
  %v715 = vld [vmem:[#allocation3 + $0x18] sm:$0xff]
  %v716 = vld [vmem:[#allocation3 + $0x20] sm:$0xff]
  %v717 = vld [vmem:[#allocation3 + $0x28] sm:$0xff]
  %v718 = vld [vmem:[#allocation3 + $0x30] sm:$0xff]
  %v719 = vld [vmem:[#allocation3 + $0x38] sm:$0xff]
  %v720 = vld [vmem:[%s4] sm:$0x1]
  %v722 = vlaneseq
  %v723 = vshrl.u32 %v722, 7
  %v724 = vsub.s32 0, %v723
  %v725 = vrot.slane %v720, %v724
  %v727 = vadd.f32 %v712, %v725
  %v728 = vadd.f32 %v713, %v725
  %v729 = vadd.f32 %v714, %v725
  %v730 = vadd.f32 %v715, %v725
  %v731 = vadd.f32 %v716, %v725
  %v732 = vadd.f32 %v717, %v725
  %v733 = vadd.f32 %v718, %v725
  %v734 = vadd.f32 %v719, %v725
  %v735 = vmax.f32 %v727, 0.0
  %v736 = vmax.f32 %v728, 0.0
  %v737 = vmax.f32 %v729, 0.0
  %v738 = vmax.f32 %v730, 0.0
  %v739 = vmax.f32 %v731, 0.0
  %v740 = vmax.f32 %v732, 0.0
  %v741 = vmax.f32 %v733, 0.0
  %v742 = vmax.f32 %v734, 0.0
  %v743 = vpack.c.bf16 %v736, %v735
  %v744 = vpack.c.bf16 %v738, %v737
  %v745 = vpack.c.bf16 %v740, %v739
  %v746 = vpack.c.bf16 %v742, %v741
  %v751 = vunpack.c.l.b16 %v743
  %v752 = vunpack.c.h.b16 %v743
  %v753 = vunpack.c.l.b16 %v744
  %v754 = vunpack.c.h.b16 %v744
  %v755 = vunpack.c.l.b16 %v745
  %v756 = vunpack.c.h.b16 %v745
  %v757 = vunpack.c.l.b16 %v746
  %v758 = vunpack.c.h.b16 %v746
  %v759 = vpack.c.b16 %v751, %v751
  %v760 = vpack.c.b16 %v752, %v752
  %v761 = vpack.c.b16 %v753, %v753
  %v762 = vpack.c.b16 %v754, %v754
  %v763 = vpack.c.b16 %v755, %v755
  %v764 = vpack.c.b16 %v756, %v756
  %v765 = vpack.c.b16 %v757, %v757
  %v766 = vpack.c.b16 %v758, %v758
  %v775 = vld [vmem:[%s5] sm:$0xf]
  %v776 = vld [vmem:[%s5 + $0x4] sm:$0xf]
  %v777 = vld [vmem:[%s5 + $0x8] sm:$0xf]
  %v778 = vld [vmem:[%s5 + $0xc] sm:$0xf]
  %v779 = vld [vmem:[%s5 + $0x10] sm:$0xf]
  %v780 = vld [vmem:[%s5 + $0x14] sm:$0xf]
  %v781 = vld [vmem:[%s5 + $0x18] sm:$0xf]
  %v782 = vld [vmem:[%s5 + $0x1c] sm:$0xf]
  %v783 = vld [vmem:[%s5 + $0x20] sm:$0xf]
  %v784 = vld [vmem:[%s5 + $0x24] sm:$0xf]
  %v785 = vld [vmem:[%s5 + $0x28] sm:$0xf]
  %v786 = vld [vmem:[%s5 + $0x2c] sm:$0xf]
  %v787 = vld [vmem:[%s5 + $0x30] sm:$0xf]
  %v788 = vld [vmem:[%s5 + $0x34] sm:$0xf]
  %v789 = vld [vmem:[%s5 + $0x38] sm:$0xf]
  %v790 = vld [vmem:[%s5 + $0x3c] sm:$0xf]
  %v791 = vld [vmem:[%s6] sm:$0x1]
  %v793 = vlaneseq
  %v794 = vshrl.u32 %v793, 7
  %v795 = vsub.s32 0, %v794
  %v796 = vrot.slane %v791, %v795
  %v814 = vunpack.c.l.b16 %v775
  %v815 = vunpack.c.l.b16 %v776
  %v816 = vunpack.c.l.b16 %v777
  %v817 = vunpack.c.l.b16 %v778
  %v818 = vunpack.c.l.b16 %v779
  %v819 = vunpack.c.l.b16 %v780
  %v820 = vunpack.c.l.b16 %v781
  %v821 = vunpack.c.l.b16 %v782
  %v822 = vunpack.c.l.b16 %v783
  %v823 = vunpack.c.l.b16 %v784
  %v824 = vunpack.c.l.b16 %v785
  %v825 = vunpack.c.l.b16 %v786
  %v826 = vunpack.c.l.b16 %v787
  %v827 = vunpack.c.l.b16 %v788
  %v828 = vunpack.c.l.b16 %v789
  %v829 = vunpack.c.l.b16 %v790
  %v830 = vpack.c.b16 %v815, %v814
  %v831 = vpack.c.b16 %v817, %v816
  %v832 = vpack.c.b16 %v819, %v818
  %v833 = vpack.c.b16 %v821, %v820
  %v834 = vpack.c.b16 %v823, %v822
  %v835 = vpack.c.b16 %v825, %v824
  %v836 = vpack.c.b16 %v827, %v826
  %v837 = vpack.c.b16 %v829, %v828
  %846 = vmatprep.subr.bf16.mxu0 0
  %847 = vmatpush1.bf16.msra.mxu0 %v830
  %848 = vmatprep.subr.bf16.mxu0 0
  %849 = vmatpush1.bf16.msra.mxu0 %v831
  %850 = vmatprep.subr.bf16.mxu0 0
  %851 = vmatpush1.bf16.msra.mxu0 %v832
  %852 = vmatprep.subr.bf16.mxu0 0
  %853 = vmatpush1.bf16.msra.mxu0 %v833
  %854 = vmatprep.subr.bf16.mxu0 0
  %855 = vmatpush1.bf16.msra.mxu0 %v834
  %856 = vmatprep.subr.bf16.mxu0 0
  %857 = vmatpush1.bf16.msra.mxu0 %v835
  %858 = vmatprep.subr.bf16.mxu0 0
  %859 = vmatpush1.bf16.msra.mxu0 %v836
  %860 = vmatprep.subr.bf16.mxu0 0
  %861 = vmatpush1.bf16.msra.mxu0 %v837
  %862 = vmatprep.subr.bf16.mxu0 0
  %863 = vmatpush1.bf16.msra.mxu0 0
  %864 = vmatprep.subr.bf16.mxu0 0
  %865 = vmatpush1.bf16.msra.mxu0 0
  %866 = vmatprep.subr.bf16.mxu0 0
  %867 = vmatpush1.bf16.msra.mxu0 0
  %868 = vmatprep.subr.bf16.mxu0 0
  %869 = vmatpush1.bf16.msra.mxu0 0
  %870 = vmatprep.subr.bf16.mxu0 0
  %871 = vmatpush1.bf16.msra.mxu0 0
  %872 = vmatprep.subr.bf16.mxu0 0
  %873 = vmatpush1.bf16.msra.mxu0 0
  %874 = vmatprep.subr.bf16.mxu0 0
  %875 = vmatpush1.bf16.msra.mxu0 0
  %876 = vmatprep.subr.bf16.mxu0 0
  %877 = vmatpush1.bf16.msra.mxu0 0
  %878 = vmatprep.mubr.bf16.mxu0 0
  %879 = vmatmul.mubr.bf16.gmra.mrb[0].mxu0 %v759
  %v880 = vpop.f32.mrb[0].mxu0
  %v881 = vadd.f32 %v796, %v880
  %v882 = vpop.f32.mrb[0].mxu0
  %v883 = vpop.f32.mrb[0].mxu0
  %v884 = vpop.f32.mrb[0].mxu0
  %885 = vdwg.mxu0
  %886 = vst [vmem:[%s7] sm:$0xff] %v881
  %v887 = vld [vmem:[%s7] sm:$0xff]
  %s888 = scalar_lea.vmem %s5, 64
  %v889 = vld [vmem:[%s888] sm:$0xf]
  %v890 = vld [vmem:[%s888 + $0x4] sm:$0xf]
  %v891 = vld [vmem:[%s888 + $0x8] sm:$0xf]
  %v892 = vld [vmem:[%s888 + $0xc] sm:$0xf]
  %v893 = vld [vmem:[%s888 + $0x10] sm:$0xf]
  %v894 = vld [vmem:[%s888 + $0x14] sm:$0xf]
  %v895 = vld [vmem:[%s888 + $0x18] sm:$0xf]
  %v896 = vld [vmem:[%s888 + $0x1c] sm:$0xf]
  %v897 = vld [vmem:[%s888 + $0x20] sm:$0xf]
  %v898 = vld [vmem:[%s888 + $0x24] sm:$0xf]
  %v899 = vld [vmem:[%s888 + $0x28] sm:$0xf]
  %v900 = vld [vmem:[%s888 + $0x2c] sm:$0xf]
  %v901 = vld [vmem:[%s888 + $0x30] sm:$0xf]
  %v902 = vld [vmem:[%s888 + $0x34] sm:$0xf]
  %v903 = vld [vmem:[%s888 + $0x38] sm:$0xf]
  %v904 = vld [vmem:[%s888 + $0x3c] sm:$0xf]
  %v921 = vunpack.c.l.b16 %v889
  %v922 = vunpack.c.l.b16 %v890
  %v923 = vunpack.c.l.b16 %v891
  %v924 = vunpack.c.l.b16 %v892
  %v925 = vunpack.c.l.b16 %v893
  %v926 = vunpack.c.l.b16 %v894
  %v927 = vunpack.c.l.b16 %v895
  %v928 = vunpack.c.l.b16 %v896
  %v929 = vunpack.c.l.b16 %v897
  %v930 = vunpack.c.l.b16 %v898
  %v931 = vunpack.c.l.b16 %v899
  %v932 = vunpack.c.l.b16 %v900
  %v933 = vunpack.c.l.b16 %v901
  %v934 = vunpack.c.l.b16 %v902
  %v935 = vunpack.c.l.b16 %v903
  %v936 = vunpack.c.l.b16 %v904
  %v937 = vpack.c.b16 %v922, %v921
  %v938 = vpack.c.b16 %v924, %v923
  %v939 = vpack.c.b16 %v926, %v925
  %v940 = vpack.c.b16 %v928, %v927
  %v941 = vpack.c.b16 %v930, %v929
  %v942 = vpack.c.b16 %v932, %v931
  %v943 = vpack.c.b16 %v934, %v933
  %v944 = vpack.c.b16 %v936, %v935
  %953 = vmatprep.subr.bf16.mxu0 0
  %954 = vmatpush1.bf16.msra.mxu0 %v937
  %955 = vmatprep.subr.bf16.mxu0 0
  %956 = vmatpush1.bf16.msra.mxu0 %v938
  %957 = vmatprep.subr.bf16.mxu0 0
  %958 = vmatpush1.bf16.msra.mxu0 %v939
  %959 = vmatprep.subr.bf16.mxu0 0
  %960 = vmatpush1.bf16.msra.mxu0 %v940
  %961 = vmatprep.subr.bf16.mxu0 0
  %962 = vmatpush1.bf16.msra.mxu0 %v941
  %963 = vmatprep.subr.bf16.mxu0 0
  %964 = vmatpush1.bf16.msra.mxu0 %v942
  %965 = vmatprep.subr.bf16.mxu0 0
  %966 = vmatpush1.bf16.msra.mxu0 %v943
  %967 = vmatprep.subr.bf16.mxu0 0
  %968 = vmatpush1.bf16.msra.mxu0 %v944
  %969 = vmatprep.subr.bf16.mxu0 0
  %970 = vmatpush1.bf16.msra.mxu0 0
  %971 = vmatprep.subr.bf16.mxu0 0
  %972 = vmatpush1.bf16.msra.mxu0 0
  %973 = vmatprep.subr.bf16.mxu0 0
  %974 = vmatpush1.bf16.msra.mxu0 0
  %975 = vmatprep.subr.bf16.mxu0 0
  %976 = vmatpush1.bf16.msra.mxu0 0
  %977 = vmatprep.subr.bf16.mxu0 0
  %978 = vmatpush1.bf16.msra.mxu0 0
  %979 = vmatprep.subr.bf16.mxu0 0
  %980 = vmatpush1.bf16.msra.mxu0 0
  %981 = vmatprep.subr.bf16.mxu0 0
  %982 = vmatpush1.bf16.msra.mxu0 0
  %983 = vmatprep.subr.bf16.mxu0 0
  %984 = vmatpush1.bf16.msra.mxu0 0
  %985 = vmatprep.mubr.bf16.mxu0 0
  %986 = vmatmul.mubr.bf16.gmra.mrb[0].mxu0 %v760
  %v987 = vpop.f32.mrb[0].mxu0
  %v988 = vadd.f32 0.0, %v987
  %v989 = vpop.f32.mrb[0].mxu0
  %v990 = vpop.f32.mrb[0].mxu0
  %v991 = vpop.f32.mrb[0].mxu0
  %992 = vdwg.mxu0
  %v993 = vadd.f32 %v887, %v988
  %994 = vst [vmem:[%s7] sm:$0xff] %v993
  %v995 = vld [vmem:[%s7] sm:$0xff]
  %s996 = scalar_lea.vmem %s5, 128
  %v997 = vld [vmem:[%s996] sm:$0xf]
  %v998 = vld [vmem:[%s996 + $0x4] sm:$0xf]
  %v999 = vld [vmem:[%s996 + $0x8] sm:$0xf]
  %v1000 = vld [vmem:[%s996 + $0xc] sm:$0xf]
  %v1001 = vld [vmem:[%s996 + $0x10] sm:$0xf]
  %v1002 = vld [vmem:[%s996 + $0x14] sm:$0xf]
  %v1003 = vld [vmem:[%s996 + $0x18] sm:$0xf]
  %v1004 = vld [vmem:[%s996 + $0x1c] sm:$0xf]
  %v1005 = vld [vmem:[%s996 + $0x20] sm:$0xf]
  %v1006 = vld [vmem:[%s996 + $0x24] sm:$0xf]
  %v1007 = vld [vmem:[%s996 + $0x28] sm:$0xf]
  %v1008 = vld [vmem:[%s996 + $0x2c] sm:$0xf]
  %v1009 = vld [vmem:[%s996 + $0x30] sm:$0xf]
  %v1010 = vld [vmem:[%s996 + $0x34] sm:$0xf]
  %v1011 = vld [vmem:[%s996 + $0x38] sm:$0xf]
  %v1012 = vld [vmem:[%s996 + $0x3c] sm:$0xf]
  %v1029 = vunpack.c.l.b16 %v997
  %v1030 = vunpack.c.l.b16 %v998
  %v1031 = vunpack.c.l.b16 %v999
  %v1032 = vunpack.c.l.b16 %v1000
  %v1033 = vunpack.c.l.b16 %v1001
  %v1034 = vunpack.c.l.b16 %v1002
  %v1035 = vunpack.c.l.b16 %v1003
  %v1036 = vunpack.c.l.b16 %v1004
  %v1037 = vunpack.c.l.b16 %v1005
  %v1038 = vunpack.c.l.b16 %v1006
  %v1039 = vunpack.c.l.b16 %v1007
  %v1040 = vunpack.c.l.b16 %v1008
  %v1041 = vunpack.c.l.b16 %v1009
  %v1042 = vunpack.c.l.b16 %v1010
  %v1043 = vunpack.c.l.b16 %v1011
  %v1044 = vunpack.c.l.b16 %v1012
  %v1045 = vpack.c.b16 %v1030, %v1029
  %v1046 = vpack.c.b16 %v1032, %v1031
  %v1047 = vpack.c.b16 %v1034, %v1033
  %v1048 = vpack.c.b16 %v1036, %v1035
  %v1049 = vpack.c.b16 %v1038, %v1037
  %v1050 = vpack.c.b16 %v1040, %v1039
  %v1051 = vpack.c.b16 %v1042, %v1041
  %v1052 = vpack.c.b16 %v1044, %v1043
  %1061 = vmatprep.subr.bf16.mxu0 0
  %1062 = vmatpush1.bf16.msra.mxu0 %v1045
  %1063 = vmatprep.subr.bf16.mxu0 0
  %1064 = vmatpush1.bf16.msra.mxu0 %v1046
  %1065 = vmatprep.subr.bf16.mxu0 0
  %1066 = vmatpush1.bf16.msra.mxu0 %v1047
  %1067 = vmatprep.subr.bf16.mxu0 0
  %1068 = vmatpush1.bf16.msra.mxu0 %v1048
  %1069 = vmatprep.subr.bf16.mxu0 0
  %1070 = vmatpush1.bf16.msra.mxu0 %v1049
  %1071 = vmatprep.subr.bf16.mxu0 0
  %1072 = vmatpush1.bf16.msra.mxu0 %v1050
  %1073 = vmatprep.subr.bf16.mxu0 0
  %1074 = vmatpush1.bf16.msra.mxu0 %v1051
  %1075 = vmatprep.subr.bf16.mxu0 0
  %1076 = vmatpush1.bf16.msra.mxu0 %v1052
  %1077 = vmatprep.subr.bf16.mxu0 0
  %1078 = vmatpush1.bf16.msra.mxu0 0
  %1079 = vmatprep.subr.bf16.mxu0 0
  %1080 = vmatpush1.bf16.msra.mxu0 0
  %1081 = vmatprep.subr.bf16.mxu0 0
  %1082 = vmatpush1.bf16.msra.mxu0 0
  %1083 = vmatprep.subr.bf16.mxu0 0
  %1084 = vmatpush1.bf16.msra.mxu0 0
  %1085 = vmatprep.subr.bf16.mxu0 0
  %1086 = vmatpush1.bf16.msra.mxu0 0
  %1087 = vmatprep.subr.bf16.mxu0 0
  %1088 = vmatpush1.bf16.msra.mxu0 0
  %1089 = vmatprep.subr.bf16.mxu0 0
  %1090 = vmatpush1.bf16.msra.mxu0 0
  %1091 = vmatprep.subr.bf16.mxu0 0
  %1092 = vmatpush1.bf16.msra.mxu0 0
  %1093 = vmatprep.mubr.bf16.mxu0 0
  %1094 = vmatmul.mubr.bf16.gmra.mrb[0].mxu0 %v761
  %v1095 = vpop.f32.mrb[0].mxu0
  %v1096 = vadd.f32 0.0, %v1095
  %v1097 = vpop.f32.mrb[0].mxu0
  %v1098 = vpop.f32.mrb[0].mxu0
  %v1099 = vpop.f32.mrb[0].mxu0
  %1100 = vdwg.mxu0
  %v1101 = vadd.f32 %v995, %v1096
  %1102 = vst [vmem:[%s7] sm:$0xff] %v1101
  %v1103 = vld [vmem:[%s7] sm:$0xff]
  %s1104 = scalar_lea.vmem %s5, 192
  %v1105 = vld [vmem:[%s1104] sm:$0xf]
  %v1106 = vld [vmem:[%s1104 + $0x4] sm:$0xf]
  %v1107 = vld [vmem:[%s1104 + $0x8] sm:$0xf]
  %v1108 = vld [vmem:[%s1104 + $0xc] sm:$0xf]
  %v1109 = vld [vmem:[%s1104 + $0x10] sm:$0xf]
  %v1110 = vld [vmem:[%s1104 + $0x14] sm:$0xf]
  %v1111 = vld [vmem:[%s1104 + $0x18] sm:$0xf]
  %v1112 = vld [vmem:[%s1104 + $0x1c] sm:$0xf]
  %v1113 = vld [vmem:[%s1104 + $0x20] sm:$0xf]
  %v1114 = vld [vmem:[%s1104 + $0x24] sm:$0xf]
  %v1115 = vld [vmem:[%s1104 + $0x28] sm:$0xf]
  %v1116 = vld [vmem:[%s1104 + $0x2c] sm:$0xf]
  %v1117 = vld [vmem:[%s1104 + $0x30] sm:$0xf]
  %v1118 = vld [vmem:[%s1104 + $0x34] sm:$0xf]
  %v1119 = vld [vmem:[%s1104 + $0x38] sm:$0xf]
  %v1120 = vld [vmem:[%s1104 + $0x3c] sm:$0xf]
  %v1137 = vunpack.c.l.b16 %v1105
  %v1138 = vunpack.c.l.b16 %v1106
  %v1139 = vunpack.c.l.b16 %v1107
  %v1140 = vunpack.c.l.b16 %v1108
  %v1141 = vunpack.c.l.b16 %v1109
  %v1142 = vunpack.c.l.b16 %v1110
  %v1143 = vunpack.c.l.b16 %v1111
  %v1144 = vunpack.c.l.b16 %v1112
  %v1145 = vunpack.c.l.b16 %v1113
  %v1146 = vunpack.c.l.b16 %v1114
  %v1147 = vunpack.c.l.b16 %v1115
  %v1148 = vunpack.c.l.b16 %v1116
  %v1149 = vunpack.c.l.b16 %v1117
  %v1150 = vunpack.c.l.b16 %v1118
  %v1151 = vunpack.c.l.b16 %v1119
  %v1152 = vunpack.c.l.b16 %v1120
  %v1153 = vpack.c.b16 %v1138, %v1137
  %v1154 = vpack.c.b16 %v1140, %v1139
  %v1155 = vpack.c.b16 %v1142, %v1141
  %v1156 = vpack.c.b16 %v1144, %v1143
  %v1157 = vpack.c.b16 %v1146, %v1145
  %v1158 = vpack.c.b16 %v1148, %v1147
  %v1159 = vpack.c.b16 %v1150, %v1149
  %v1160 = vpack.c.b16 %v1152, %v1151
  %1169 = vmatprep.subr.bf16.mxu0 0
  %1170 = vmatpush1.bf16.msra.mxu0 %v1153
  %1171 = vmatprep.subr.bf16.mxu0 0
  %1172 = vmatpush1.bf16.msra.mxu0 %v1154
  %1173 = vmatprep.subr.bf16.mxu0 0
  %1174 = vmatpush1.bf16.msra.mxu0 %v1155
  %1175 = vmatprep.subr.bf16.mxu0 0
  %1176 = vmatpush1.bf16.msra.mxu0 %v1156
  %1177 = vmatprep.subr.bf16.mxu0 0
  %1178 = vmatpush1.bf16.msra.mxu0 %v1157
  %1179 = vmatprep.subr.bf16.mxu0 0
  %1180 = vmatpush1.bf16.msra.mxu0 %v1158
  %1181 = vmatprep.subr.bf16.mxu0 0
  %1182 = vmatpush1.bf16.msra.mxu0 %v1159
  %1183 = vmatprep.subr.bf16.mxu0 0
  %1184 = vmatpush1.bf16.msra.mxu0 %v1160
  %1185 = vmatprep.subr.bf16.mxu0 0
  %1186 = vmatpush1.bf16.msra.mxu0 0
  %1187 = vmatprep.subr.bf16.mxu0 0
  %1188 = vmatpush1.bf16.msra.mxu0 0
  %1189 = vmatprep.subr.bf16.mxu0 0
  %1190 = vmatpush1.bf16.msra.mxu0 0
  %1191 = vmatprep.subr.bf16.mxu0 0
  %1192 = vmatpush1.bf16.msra.mxu0 0
  %1193 = vmatprep.subr.bf16.mxu0 0
  %1194 = vmatpush1.bf16.msra.mxu0 0
  %1195 = vmatprep.subr.bf16.mxu0 0
  %1196 = vmatpush1.bf16.msra.mxu0 0
  %1197 = vmatprep.subr.bf16.mxu0 0
  %1198 = vmatpush1.bf16.msra.mxu0 0
  %1199 = vmatprep.subr.bf16.mxu0 0
  %1200 = vmatpush1.bf16.msra.mxu0 0
  %1201 = vmatprep.mubr.bf16.mxu0 0
  %1202 = vmatmul.mubr.bf16.gmra.mrb[0].mxu0 %v762
  %v1203 = vpop.f32.mrb[0].mxu0
  %v1204 = vadd.f32 0.0, %v1203
  %v1205 = vpop.f32.mrb[0].mxu0
  %v1206 = vpop.f32.mrb[0].mxu0
  %v1207 = vpop.f32.mrb[0].mxu0
  %1208 = vdwg.mxu0
  %v1209 = vadd.f32 %v1103, %v1204
  %1210 = vst [vmem:[%s7] sm:$0xff] %v1209
  %v1211 = vld [vmem:[%s7] sm:$0xff]
  %s1212 = scalar_lea.vmem %s5, 256
  %v1213 = vld [vmem:[%s1212] sm:$0xf]
  %v1214 = vld [vmem:[%s1212 + $0x4] sm:$0xf]
  %v1215 = vld [vmem:[%s1212 + $0x8] sm:$0xf]
  %v1216 = vld [vmem:[%s1212 + $0xc] sm:$0xf]
  %v1217 = vld [vmem:[%s1212 + $0x10] sm:$0xf]
  %v1218 = vld [vmem:[%s1212 + $0x14] sm:$0xf]
  %v1219 = vld [vmem:[%s1212 + $0x18] sm:$0xf]
  %v1220 = vld [vmem:[%s1212 + $0x1c] sm:$0xf]
  %v1221 = vld [vmem:[%s1212 + $0x20] sm:$0xf]
  %v1222 = vld [vmem:[%s1212 + $0x24] sm:$0xf]
  %v1223 = vld [vmem:[%s1212 + $0x28] sm:$0xf]
  %v1224 = vld [vmem:[%s1212 + $0x2c] sm:$0xf]
  %v1225 = vld [vmem:[%s1212 + $0x30] sm:$0xf]
  %v1226 = vld [vmem:[%s1212 + $0x34] sm:$0xf]
  %v1227 = vld [vmem:[%s1212 + $0x38] sm:$0xf]
  %v1228 = vld [vmem:[%s1212 + $0x3c] sm:$0xf]
  %v1245 = vunpack.c.l.b16 %v1213
  %v1246 = vunpack.c.l.b16 %v1214
  %v1247 = vunpack.c.l.b16 %v1215
  %v1248 = vunpack.c.l.b16 %v1216
  %v1249 = vunpack.c.l.b16 %v1217
  %v1250 = vunpack.c.l.b16 %v1218
  %v1251 = vunpack.c.l.b16 %v1219
  %v1252 = vunpack.c.l.b16 %v1220
  %v1253 = vunpack.c.l.b16 %v1221
  %v1254 = vunpack.c.l.b16 %v1222
  %v1255 = vunpack.c.l.b16 %v1223
  %v1256 = vunpack.c.l.b16 %v1224
  %v1257 = vunpack.c.l.b16 %v1225
  %v1258 = vunpack.c.l.b16 %v1226
  %v1259 = vunpack.c.l.b16 %v1227
  %v1260 = vunpack.c.l.b16 %v1228
  %v1261 = vpack.c.b16 %v1246, %v1245
  %v1262 = vpack.c.b16 %v1248, %v1247
  %v1263 = vpack.c.b16 %v1250, %v1249
  %v1264 = vpack.c.b16 %v1252, %v1251
  %v1265 = vpack.c.b16 %v1254, %v1253
  %v1266 = vpack.c.b16 %v1256, %v1255
  %v1267 = vpack.c.b16 %v1258, %v1257
  %v1268 = vpack.c.b16 %v1260, %v1259
  %1277 = vmatprep.subr.bf16.mxu0 0
  %1278 = vmatpush1.bf16.msra.mxu0 %v1261
  %1279 = vmatprep.subr.bf16.mxu0 0
  %1280 = vmatpush1.bf16.msra.mxu0 %v1262
  %1281 = vmatprep.subr.bf16.mxu0 0
  %1282 = vmatpush1.bf16.msra.mxu0 %v1263
  %1283 = vmatprep.subr.bf16.mxu0 0
  %1284 = vmatpush1.bf16.msra.mxu0 %v1264
  %1285 = vmatprep.subr.bf16.mxu0 0
  %1286 = vmatpush1.bf16.msra.mxu0 %v1265
  %1287 = vmatprep.subr.bf16.mxu0 0
  %1288 = vmatpush1.bf16.msra.mxu0 %v1266
  %1289 = vmatprep.subr.bf16.mxu0 0
  %1290 = vmatpush1.bf16.msra.mxu0 %v1267
  %1291 = vmatprep.subr.bf16.mxu0 0
  %1292 = vmatpush1.bf16.msra.mxu0 %v1268
  %1293 = vmatprep.subr.bf16.mxu0 0
  %1294 = vmatpush1.bf16.msra.mxu0 0
  %1295 = vmatprep.subr.bf16.mxu0 0
  %1296 = vmatpush1.bf16.msra.mxu0 0
  %1297 = vmatprep.subr.bf16.mxu0 0
  %1298 = vmatpush1.bf16.msra.mxu0 0
  %1299 = vmatprep.subr.bf16.mxu0 0
  %1300 = vmatpush1.bf16.msra.mxu0 0
  %1301 = vmatprep.subr.bf16.mxu0 0
  %1302 = vmatpush1.bf16.msra.mxu0 0
  %1303 = vmatprep.subr.bf16.mxu0 0
  %1304 = vmatpush1.bf16.msra.mxu0 0
  %1305 = vmatprep.subr.bf16.mxu0 0
  %1306 = vmatpush1.bf16.msra.mxu0 0
  %1307 = vmatprep.subr.bf16.mxu0 0
  %1308 = vmatpush1.bf16.msra.mxu0 0
  %1309 = vmatprep.mubr.bf16.mxu0 0
  %1310 = vmatmul.mubr.bf16.gmra.mrb[0].mxu0 %v763
  %v1311 = vpop.f32.mrb[0].mxu0
  %v1312 = vadd.f32 0.0, %v1311
  %v1313 = vpop.f32.mrb[0].mxu0
  %v1314 = vpop.f32.mrb[0].mxu0
  %v1315 = vpop.f32.mrb[0].mxu0
  %1316 = vdwg.mxu0
  %v1317 = vadd.f32 %v1211, %v1312
  %1318 = vst [vmem:[%s7] sm:$0xff] %v1317
  %v1319 = vld [vmem:[%s7] sm:$0xff]
  %s1320 = scalar_lea.vmem %s5, 320
  %v1321 = vld [vmem:[%s1320] sm:$0xf]
  %v1322 = vld [vmem:[%s1320 + $0x4] sm:$0xf]
  %v1323 = vld [vmem:[%s1320 + $0x8] sm:$0xf]
  %v1324 = vld [vmem:[%s1320 + $0xc] sm:$0xf]
  %v1325 = vld [vmem:[%s1320 + $0x10] sm:$0xf]
  %v1326 = vld [vmem:[%s1320 + $0x14] sm:$0xf]
  %v1327 = vld [vmem:[%s1320 + $0x18] sm:$0xf]
  %v1328 = vld [vmem:[%s1320 + $0x1c] sm:$0xf]
  %v1329 = vld [vmem:[%s1320 + $0x20] sm:$0xf]
  %v1330 = vld [vmem:[%s1320 + $0x24] sm:$0xf]
  %v1331 = vld [vmem:[%s1320 + $0x28] sm:$0xf]
  %v1332 = vld [vmem:[%s1320 + $0x2c] sm:$0xf]
  %v1333 = vld [vmem:[%s1320 + $0x30] sm:$0xf]
  %v1334 = vld [vmem:[%s1320 + $0x34] sm:$0xf]
  %v1335 = vld [vmem:[%s1320 + $0x38] sm:$0xf]
  %v1336 = vld [vmem:[%s1320 + $0x3c] sm:$0xf]
  %v1353 = vunpack.c.l.b16 %v1321
  %v1354 = vunpack.c.l.b16 %v1322
  %v1355 = vunpack.c.l.b16 %v1323
  %v1356 = vunpack.c.l.b16 %v1324
  %v1357 = vunpack.c.l.b16 %v1325
  %v1358 = vunpack.c.l.b16 %v1326
  %v1359 = vunpack.c.l.b16 %v1327
  %v1360 = vunpack.c.l.b16 %v1328
  %v1361 = vunpack.c.l.b16 %v1329
  %v1362 = vunpack.c.l.b16 %v1330
  %v1363 = vunpack.c.l.b16 %v1331
  %v1364 = vunpack.c.l.b16 %v1332
  %v1365 = vunpack.c.l.b16 %v1333
  %v1366 = vunpack.c.l.b16 %v1334
  %v1367 = vunpack.c.l.b16 %v1335
  %v1368 = vunpack.c.l.b16 %v1336
  %v1369 = vpack.c.b16 %v1354, %v1353
  %v1370 = vpack.c.b16 %v1356, %v1355
  %v1371 = vpack.c.b16 %v1358, %v1357
  %v1372 = vpack.c.b16 %v1360, %v1359
  %v1373 = vpack.c.b16 %v1362, %v1361
  %v1374 = vpack.c.b16 %v1364, %v1363
  %v1375 = vpack.c.b16 %v1366, %v1365
  %v1376 = vpack.c.b16 %v1368, %v1367
  %1385 = vmatprep.subr.bf16.mxu0 0
  %1386 = vmatpush1.bf16.msra.mxu0 %v1369
  %1387 = vmatprep.subr.bf16.mxu0 0
  %1388 = vmatpush1.bf16.msra.mxu0 %v1370
  %1389 = vmatprep.subr.bf16.mxu0 0
  %1390 = vmatpush1.bf16.msra.mxu0 %v1371
  %1391 = vmatprep.subr.bf16.mxu0 0
  %1392 = vmatpush1.bf16.msra.mxu0 %v1372
  %1393 = vmatprep.subr.bf16.mxu0 0
  %1394 = vmatpush1.bf16.msra.mxu0 %v1373
  %1395 = vmatprep.subr.bf16.mxu0 0
  %1396 = vmatpush1.bf16.msra.mxu0 %v1374
  %1397 = vmatprep.subr.bf16.mxu0 0
  %1398 = vmatpush1.bf16.msra.mxu0 %v1375
  %1399 = vmatprep.subr.bf16.mxu0 0
  %1400 = vmatpush1.bf16.msra.mxu0 %v1376
  %1401 = vmatprep.subr.bf16.mxu0 0
  %1402 = vmatpush1.bf16.msra.mxu0 0
  %1403 = vmatprep.subr.bf16.mxu0 0
  %1404 = vmatpush1.bf16.msra.mxu0 0
  %1405 = vmatprep.subr.bf16.mxu0 0
  %1406 = vmatpush1.bf16.msra.mxu0 0
  %1407 = vmatprep.subr.bf16.mxu0 0
  %1408 = vmatpush1.bf16.msra.mxu0 0
  %1409 = vmatprep.subr.bf16.mxu0 0
  %1410 = vmatpush1.bf16.msra.mxu0 0
  %1411 = vmatprep.subr.bf16.mxu0 0
  %1412 = vmatpush1.bf16.msra.mxu0 0
  %1413 = vmatprep.subr.bf16.mxu0 0
  %1414 = vmatpush1.bf16.msra.mxu0 0
  %1415 = vmatprep.subr.bf16.mxu0 0
  %1416 = vmatpush1.bf16.msra.mxu0 0
  %1417 = vmatprep.mubr.bf16.mxu0 0
  %1418 = vmatmul.mubr.bf16.gmra.mrb[0].mxu0 %v764
  %v1419 = vpop.f32.mrb[0].mxu0
  %v1420 = vadd.f32 0.0, %v1419
  %v1421 = vpop.f32.mrb[0].mxu0
  %v1422 = vpop.f32.mrb[0].mxu0
  %v1423 = vpop.f32.mrb[0].mxu0
  %1424 = vdwg.mxu0
  %v1425 = vadd.f32 %v1319, %v1420
  %1426 = vst [vmem:[%s7] sm:$0xff] %v1425
  %v1427 = vld [vmem:[%s7] sm:$0xff]
  %s1428 = scalar_lea.vmem %s5, 384
  %v1429 = vld [vmem:[%s1428] sm:$0xf]
  %v1430 = vld [vmem:[%s1428 + $0x4] sm:$0xf]
  %v1431 = vld [vmem:[%s1428 + $0x8] sm:$0xf]
  %v1432 = vld [vmem:[%s1428 + $0xc] sm:$0xf]
  %v1433 = vld [vmem:[%s1428 + $0x10] sm:$0xf]
  %v1434 = vld [vmem:[%s1428 + $0x14] sm:$0xf]
  %v1435 = vld [vmem:[%s1428 + $0x18] sm:$0xf]
  %v1436 = vld [vmem:[%s1428 + $0x1c] sm:$0xf]
  %v1437 = vld [vmem:[%s1428 + $0x20] sm:$0xf]
  %v1438 = vld [vmem:[%s1428 + $0x24] sm:$0xf]
  %v1439 = vld [vmem:[%s1428 + $0x28] sm:$0xf]
  %v1440 = vld [vmem:[%s1428 + $0x2c] sm:$0xf]
  %v1441 = vld [vmem:[%s1428 + $0x30] sm:$0xf]
  %v1442 = vld [vmem:[%s1428 + $0x34] sm:$0xf]
  %v1443 = vld [vmem:[%s1428 + $0x38] sm:$0xf]
  %v1444 = vld [vmem:[%s1428 + $0x3c] sm:$0xf]
  %v1461 = vunpack.c.l.b16 %v1429
  %v1462 = vunpack.c.l.b16 %v1430
  %v1463 = vunpack.c.l.b16 %v1431
  %v1464 = vunpack.c.l.b16 %v1432
  %v1465 = vunpack.c.l.b16 %v1433
  %v1466 = vunpack.c.l.b16 %v1434
  %v1467 = vunpack.c.l.b16 %v1435
  %v1468 = vunpack.c.l.b16 %v1436
  %v1469 = vunpack.c.l.b16 %v1437
  %v1470 = vunpack.c.l.b16 %v1438
  %v1471 = vunpack.c.l.b16 %v1439
  %v1472 = vunpack.c.l.b16 %v1440
  %v1473 = vunpack.c.l.b16 %v1441
  %v1474 = vunpack.c.l.b16 %v1442
  %v1475 = vunpack.c.l.b16 %v1443
  %v1476 = vunpack.c.l.b16 %v1444
  %v1477 = vpack.c.b16 %v1462, %v1461
  %v1478 = vpack.c.b16 %v1464, %v1463
  %v1479 = vpack.c.b16 %v1466, %v1465
  %v1480 = vpack.c.b16 %v1468, %v1467
  %v1481 = vpack.c.b16 %v1470, %v1469
  %v1482 = vpack.c.b16 %v1472, %v1471
  %v1483 = vpack.c.b16 %v1474, %v1473
  %v1484 = vpack.c.b16 %v1476, %v1475
  %1493 = vmatprep.subr.bf16.mxu0 0
  %1494 = vmatpush1.bf16.msra.mxu0 %v1477
  %1495 = vmatprep.subr.bf16.mxu0 0
  %1496 = vmatpush1.bf16.msra.mxu0 %v1478
  %1497 = vmatprep.subr.bf16.mxu0 0
  %1498 = vmatpush1.bf16.msra.mxu0 %v1479
  %1499 = vmatprep.subr.bf16.mxu0 0
  %1500 = vmatpush1.bf16.msra.mxu0 %v1480
  %1501 = vmatprep.subr.bf16.mxu0 0
  %1502 = vmatpush1.bf16.msra.mxu0 %v1481
  %1503 = vmatprep.subr.bf16.mxu0 0
  %1504 = vmatpush1.bf16.msra.mxu0 %v1482
  %1505 = vmatprep.subr.bf16.mxu0 0
  %1506 = vmatpush1.bf16.msra.mxu0 %v1483
  %1507 = vmatprep.subr.bf16.mxu0 0
  %1508 = vmatpush1.bf16.msra.mxu0 %v1484
  %1509 = vmatprep.subr.bf16.mxu0 0
  %1510 = vmatpush1.bf16.msra.mxu0 0
  %1511 = vmatprep.subr.bf16.mxu0 0
  %1512 = vmatpush1.bf16.msra.mxu0 0
  %1513 = vmatprep.subr.bf16.mxu0 0
  %1514 = vmatpush1.bf16.msra.mxu0 0
  %1515 = vmatprep.subr.bf16.mxu0 0
  %1516 = vmatpush1.bf16.msra.mxu0 0
  %1517 = vmatprep.subr.bf16.mxu0 0
  %1518 = vmatpush1.bf16.msra.mxu0 0
  %1519 = vmatprep.subr.bf16.mxu0 0
  %1520 = vmatpush1.bf16.msra.mxu0 0
  %1521 = vmatprep.subr.bf16.mxu0 0
  %1522 = vmatpush1.bf16.msra.mxu0 0
  %1523 = vmatprep.subr.bf16.mxu0 0
  %1524 = vmatpush1.bf16.msra.mxu0 0
  %1525 = vmatprep.mubr.bf16.mxu0 0
  %1526 = vmatmul.mubr.bf16.gmra.mrb[0].mxu0 %v765
  %v1527 = vpop.f32.mrb[0].mxu0
  %v1528 = vadd.f32 0.0, %v1527
  %v1529 = vpop.f32.mrb[0].mxu0
  %v1530 = vpop.f32.mrb[0].mxu0
  %v1531 = vpop.f32.mrb[0].mxu0
  %1532 = vdwg.mxu0
  %v1533 = vadd.f32 %v1427, %v1528
  %1534 = vst [vmem:[%s7] sm:$0xff] %v1533
  %v1535 = vld [vmem:[%s7] sm:$0xff]
  %s1536 = scalar_lea.vmem %s5, 448
  %v1537 = vld [vmem:[%s1536] sm:$0xf]
  %v1538 = vld [vmem:[%s1536 + $0x4] sm:$0xf]
  %v1539 = vld [vmem:[%s1536 + $0x8] sm:$0xf]
  %v1540 = vld [vmem:[%s1536 + $0xc] sm:$0xf]
  %v1541 = vld [vmem:[%s1536 + $0x10] sm:$0xf]
  %v1542 = vld [vmem:[%s1536 + $0x14] sm:$0xf]
  %v1543 = vld [vmem:[%s1536 + $0x18] sm:$0xf]
  %v1544 = vld [vmem:[%s1536 + $0x1c] sm:$0xf]
  %v1545 = vld [vmem:[%s1536 + $0x20] sm:$0xf]
  %v1546 = vld [vmem:[%s1536 + $0x24] sm:$0xf]
  %v1547 = vld [vmem:[%s1536 + $0x28] sm:$0xf]
  %v1548 = vld [vmem:[%s1536 + $0x2c] sm:$0xf]
  %v1549 = vld [vmem:[%s1536 + $0x30] sm:$0xf]
  %v1550 = vld [vmem:[%s1536 + $0x34] sm:$0xf]
  %v1551 = vld [vmem:[%s1536 + $0x38] sm:$0xf]
  %v1552 = vld [vmem:[%s1536 + $0x3c] sm:$0xf]
  %v1569 = vunpack.c.l.b16 %v1537
  %v1570 = vunpack.c.l.b16 %v1538
  %v1571 = vunpack.c.l.b16 %v1539
  %v1572 = vunpack.c.l.b16 %v1540
  %v1573 = vunpack.c.l.b16 %v1541
  %v1574 = vunpack.c.l.b16 %v1542
  %v1575 = vunpack.c.l.b16 %v1543
  %v1576 = vunpack.c.l.b16 %v1544
  %v1577 = vunpack.c.l.b16 %v1545
  %v1578 = vunpack.c.l.b16 %v1546
  %v1579 = vunpack.c.l.b16 %v1547
  %v1580 = vunpack.c.l.b16 %v1548
  %v1581 = vunpack.c.l.b16 %v1549
  %v1582 = vunpack.c.l.b16 %v1550
  %v1583 = vunpack.c.l.b16 %v1551
  %v1584 = vunpack.c.l.b16 %v1552
  %v1585 = vpack.c.b16 %v1570, %v1569
  %v1586 = vpack.c.b16 %v1572, %v1571
  %v1587 = vpack.c.b16 %v1574, %v1573
  %v1588 = vpack.c.b16 %v1576, %v1575
  %v1589 = vpack.c.b16 %v1578, %v1577
  %v1590 = vpack.c.b16 %v1580, %v1579
  %v1591 = vpack.c.b16 %v1582, %v1581
  %v1592 = vpack.c.b16 %v1584, %v1583
  %1601 = vmatprep.subr.bf16.mxu0 0
  %1602 = vmatpush1.bf16.msra.mxu0 %v1585
  %1603 = vmatprep.subr.bf16.mxu0 0
  %1604 = vmatpush1.bf16.msra.mxu0 %v1586
  %1605 = vmatprep.subr.bf16.mxu0 0
  %1606 = vmatpush1.bf16.msra.mxu0 %v1587
  %1607 = vmatprep.subr.bf16.mxu0 0
  %1608 = vmatpush1.bf16.msra.mxu0 %v1588
  %1609 = vmatprep.subr.bf16.mxu0 0
  %1610 = vmatpush1.bf16.msra.mxu0 %v1589
  %1611 = vmatprep.subr.bf16.mxu0 0
  %1612 = vmatpush1.bf16.msra.mxu0 %v1590
  %1613 = vmatprep.subr.bf16.mxu0 0
  %1614 = vmatpush1.bf16.msra.mxu0 %v1591
  %1615 = vmatprep.subr.bf16.mxu0 0
  %1616 = vmatpush1.bf16.msra.mxu0 %v1592
  %1617 = vmatprep.subr.bf16.mxu0 0
  %1618 = vmatpush1.bf16.msra.mxu0 0
  %1619 = vmatprep.subr.bf16.mxu0 0
  %1620 = vmatpush1.bf16.msra.mxu0 0
  %1621 = vmatprep.subr.bf16.mxu0 0
  %1622 = vmatpush1.bf16.msra.mxu0 0
  %1623 = vmatprep.subr.bf16.mxu0 0
  %1624 = vmatpush1.bf16.msra.mxu0 0
  %1625 = vmatprep.subr.bf16.mxu0 0
  %1626 = vmatpush1.bf16.msra.mxu0 0
  %1627 = vmatprep.subr.bf16.mxu0 0
  %1628 = vmatpush1.bf16.msra.mxu0 0
  %1629 = vmatprep.subr.bf16.mxu0 0
  %1630 = vmatpush1.bf16.msra.mxu0 0
  %1631 = vmatprep.subr.bf16.mxu0 0
  %1632 = vmatpush1.bf16.msra.mxu0 0
  %1633 = vmatprep.mubr.bf16.mxu0 0
  %1634 = vmatmul.mubr.bf16.gmra.mrb[0].mxu0 %v766
  %v1635 = vpop.f32.mrb[0].mxu0
  %v1636 = vadd.f32 0.0, %v1635
  %v1637 = vpop.f32.mrb[0].mxu0
  %v1638 = vpop.f32.mrb[0].mxu0
  %v1639 = vpop.f32.mrb[0].mxu0
  %1640 = vdwg.mxu0
  %v1641 = vadd.f32 %v1535, %v1636
  %1642 = vst [vmem:[%s7] sm:$0xff] %v1641
  // Predicated region
  $region30: #{chess_model_forward.1} parent=0 // pred_check
    _
  $region31: #{chess_model_forward.1} parent=0 // pred_check_branch
    %1644 = sbr.rel (0) target = $region33
  $region32: #{chess_model_forward.1} parent=0 // pred_region
    _
  $region33: #{chess_model_forward.1} parent=0 // pred_fallthru
    _
  // Predicated region
  $region34: #{chess_model_forward.1} parent=0 // pred_check
    _
  $region35: #{chess_model_forward.1} parent=0 // pred_check_branch
    %1646 = sbr.rel (0) target = $region37
  $region36: #{chess_model_forward.1} parent=0 // pred_region
    _
  $region37: #{chess_model_forward.1} parent=0 // pred_fallthru
    _

</llo_original>
